<compile_context>
chip_gen: v6e
topology: v6e:2x2x1
jax: 0.10.0
libtpu: 0.0.40
codegen_flags: <defaults>
</compile_context>

<pallas_src>
import functools

import jax
import jax.numpy as jnp
from jax.experimental import pallas as pl
from jax.experimental.pallas import tpu as pltpu


# ----------------------------------------------------------------------------
# Pallas kernel: all four convs, whole batch, one matmul, one store.
# ----------------------------------------------------------------------------
def _fused_conv_kernel(lhs_ref, rhs_ref, brow_ref, out_ref):
    # lhs_ref:  (N*H, 3*W*Cin)   kh-concatenated, H-padded input rows
    # rhs_ref:  (3*W*Cin, W*256) Toeplitz-expanded [conv0|conv2|conv3|conv1]
    # brow_ref: (1, W*256)       bias row, lanes = (j, co): [b0, 0, 0, 0] per j
    # out_ref:  (N*H, W*256)     lane-dense packed output
    out_ref[...] = (
        jnp.dot(lhs_ref[...], rhs_ref[...], preferred_element_type=jnp.float32)
        + brow_ref[...]
    )


def fused_convs(packed, x_nhwc):
    """Runs the fused kernel; returns (N, H, W, 256) packed conv outputs.

    channels   0: 64  = conv0(x)   (3x3, pad 1, bias)
    channels  64:128  = conv2(x)   (3x3, pad 1)
    channels 128:192  = conv3(x)   (1x1)
    channels 192:256  = conv1-at-every-position(x); stride-2 result is the
                        ::2, ::2 spatial subsample of this slab.
    """
    n, h, w, cin = x_nhwc.shape
    rhs, brow, cf = packed["rhs"], packed["brow"], packed["cf"]
    wc = w * cin
    m = n * h
    k = rhs.shape[0]          # 3 * W * Cin
    cfw = rhs.shape[1]        # W * 256 output lanes

    # Wrapper-side LHS construction: H-pad the tiny input and concatenate the
    # three kh-shifted views along K so the kernel never does sublane-shift
    # relayouts or read-modify-write accumulation (the W / kw padding is
    # folded into the Toeplitz weights).
    xp = jnp.pad(x_nhwc.reshape(n, h, wc), ((0, 0), (1, 1), (0, 0)))
    lhs = jnp.concatenate(
        [xp[:, 0:h, :], xp[:, 1:h + 1, :], xp[:, 2:h + 2, :]], axis=-1
    ).reshape(m, k)

    out = pl.pallas_call(
        _fused_conv_kernel,
        out_shape=jax.ShapeDtypeStruct((m, cfw), jnp.float32),
        grid_spec=pltpu.PrefetchScalarGridSpec(
            num_scalar_prefetch=0,
            grid=(1,),                                # whole batch = one step
            in_specs=[
                pl.BlockSpec((m, k), lambda i: (0, 0)),
                pl.BlockSpec(rhs.shape, lambda i: (0, 0)),
                pl.BlockSpec(brow.shape, lambda i: (0, 0)),
            ],
            out_specs=pl.BlockSpec((m, cfw), lambda i: (0, 0)),
        ),
        compiler_params=pltpu.CompilerParams(
            dimension_semantics=("arbitrary",),
        ),
    )(lhs, rhs, brow)

    return out.reshape(n, h, w, cf)


# ----------------------------------------------------------------------------
# Parameter init / packing (done once, outside the hot path).
# ----------------------------------------------------------------------------
def init_params(key):
    def conv_w(k, kh, kw, cin, cout):
        bound = 1.0 / (cin * kh * kw) ** 0.5
        return jax.random.uniform(k, (kh, kw, cin, cout), jnp.float32, -bound, bound)

    k0, k0b, k1, k2, k3 = jax.random.split(key, 5)
    return {
        # conv0: Conv2d(3, 64, 3, stride=1, padding=1), bias
        "w0": conv_w(k0, 3, 3, 3, 64),
        "b0": jax.random.uniform(k0b, (64,), jnp.float32,
                                 -1.0 / 27.0 ** 0.5, 1.0 / 27.0 ** 0.5),
        # conv1: Conv2d(3, 64, 1, stride=2, padding=0), no bias
        "w1": conv_w(k1, 1, 1, 3, 64),
        # TODO(synk): conv2/conv3 are declared with in_channels=64 in the torch
        # module but applied to the 3-channel input; built with in_channels=3
        # so the forward is computable (same as the original port).
        "w2": conv_w(k2, 3, 3, 3, 64),   # conv2: 3x3, stride=1, padding=1
        "w3": conv_w(k3, 1, 1, 3, 64),   # conv3: 1x1, stride=1, padding=0
    }


def pack_params(params, *, width):
    """Pre-expand all four conv weights into ONE Toeplitz matmul RHS."""
    w0, w1, w2, w3, b0 = (params["w0"], params["w1"], params["w2"],
                          params["w3"], params["b0"])
    kh_, kw_, cin, cout = w0.shape            # (3, 3, 3, 64)
    w_ = width
    cf = 4 * cout                             # 256 packed output channels

    w33 = jnp.concatenate([w0, w2], axis=-1)                     # (3,3,3,128)
    w11 = jnp.concatenate([w3[0, 0], w1[0, 0]], axis=-1)         # (3,128) [conv3|conv1]

    def expand(sel, wmat):
        # sel: (W_in, j) column selector, wmat: (Cin, C) -> (W_in, Cin, j, C)
        return jnp.einsum("wj,cd->wcjd", sel, wmat)

    # 3x3 band (conv0|conv2): one Toeplitz block per kernel row kh.
    # sel[w_in, j] = 1 iff w_in == j + kw - 1 (the W padding folded in here).
    rhs33 = jnp.stack([
        sum(expand(jnp.eye(w_, w_, k=1 - kw, dtype=jnp.float32), w33[kh, kw])
            for kw in range(kw_))
        for kh in range(kh_)
    ], axis=0)                                                   # (3,W,Cin,W,128)

    # 1x1 (conv3|conv1): only the centre kernel row (kh=1) contributes.
    rhs11_mid = expand(jnp.eye(w_, dtype=jnp.float32), w11)      # (W,Cin,W,128)
    z11 = jnp.zeros_like(rhs11_mid)
    rhs11 = jnp.stack([z11, rhs11_mid, z11], axis=0)             # (3,W,Cin,W,128)

    rhs = jnp.concatenate([rhs33, rhs11], axis=-1)               # (3,W,Cin,W,256)
    rhs = rhs.reshape(kh_ * w_ * cin, w_ * cf)                   # (3*W*Cin, W*256)

    b_block = jnp.concatenate([b0, jnp.zeros((cf - cout,), jnp.float32)])
    brow = jnp.tile(b_block, w_).reshape(1, w_ * cf)             # lanes = (j, co)

    return {"rhs": rhs, "brow": brow, "cf": cf}


# ----------------------------------------------------------------------------
# Forward pass (semantics of the reference module).
# ----------------------------------------------------------------------------
def forward(packed, v1_nchw):
    x = jnp.transpose(v1_nchw, (0, 2, 3, 1))          # NCHW -> NHWC
    o = fused_convs(packed, x)                        # (N, H, W, 256)

    # split+cat chains on conv0's output along dim 1 are the identity.
    y0 = jnp.transpose(o[..., 0:64], (0, 3, 1, 2))               # (N, 64, H, W)

    # TODO(synk): torch.split([1]*k, dim=1) with k in {7,6,4} on 64-channel
    # tensors would raise in PyTorch; the returned splits are the first k
    # single-channel slices.  Slice the needed channels first, then transpose.
    y1k = jnp.transpose(o[:, ::2, ::2, 192:192 + 7], (0, 3, 1, 2))  # conv1 (stride 2)
    y2k = jnp.transpose(o[..., 64:64 + 6], (0, 3, 1, 2))            # conv2
    y3k = jnp.transpose(o[..., 128:128 + 4], (0, 3, 1, 2))          # conv3

    split1 = lambda t, k: tuple(t[:, i:i + 1] for i in range(k))
    return (y0, split1(y1k, 7), split1(y2k, 6), split1(y3k, 4))


def _conv_ref(x_nhwc, w_hwio, bias, *, stride, padding):
    out = jax.lax.conv_general_dilated(
        x_nhwc, w_hwio, (stride, stride),
        [(padding, padding), (padding, padding)],
        dimension_numbers=("NHWC", "HWIO", "NHWC"),
    )
    if bias is not None:
        out = out + bias
    return out


if __name__ == "__main__":
    key = jax.random.PRNGKey(0)
    pkey, xkey = jax.random.split(key)
    params = init_params(pkey)

    v1 = jax.random.normal(xkey, (2, 3, 16, 16), jnp.float32)   # NCHW, like torch
    packed = pack_params(params, width=v1.shape[-1])

    out = jax.jit(functools.partial(forward, packed))(v1)
    jax.block_until_ready(out)

    # --- correctness: fused Pallas convs vs XLA's conv_general_dilated ------
    x_nhwc = jnp.transpose(v1, (0, 2, 3, 1))
    o = jax.jit(functools.partial(fused_convs, packed))(x_nhwc)
    jax.block_until_ready(o)

    checks = [
        (o[..., 0:64],
         _conv_ref(x_nhwc, params["w0"], params["b0"], stride=1, padding=1)),
        (o[..., 64:128],
         _conv_ref(x_nhwc, params["w2"], None, stride=1, padding=1)),
        (o[..., 128:192],
         _conv_ref(x_nhwc, params["w3"], None, stride=1, padding=0)),
        (o[:, ::2, ::2, 192:256],
         _conv_ref(x_nhwc, params["w1"], None, stride=2, padding=0)),
    ]
    for got, want in checks:
        assert got.shape == want.shape, (got.shape, want.shape)
        assert jnp.allclose(got, want, atol=1e-3, rtol=1e-3), "conv mismatch"

    # Output structure / shapes implied by the reference module.
    assert out[0].shape == (2, 64, 16, 16)
    assert len(out[1]) == 7 and out[1][0].shape == (2, 1, 8, 8)
    assert len(out[2]) == 6 and out[2][0].shape == (2, 1, 16, 16)
    assert len(out[3]) == 4 and out[3][0].shape == (2, 1, 16, 16)
    # conv0's output must survive the identity split+cat chain in NCHW.
    y0_want = jnp.transpose(
        _conv_ref(x_nhwc, params["w0"], params["b0"], stride=1, padding=1),
        (0, 3, 1, 2))
    assert jnp.allclose(out[0], y0_want, atol=1e-3, rtol=1e-3)

    print("KERNEL_OK")
</pallas_src>

<mosaic_0001>
module attributes {stable_mosaic.version = 11 : i64} {
  func.func @_fused_conv_kernel(%arg0: i32, %arg1: memref<32x144xf32, #tpu.memory_space<vmem>>, %arg2: memref<144x4096xf32, #tpu.memory_space<vmem>>, %arg3: memref<1x4096xf32, #tpu.memory_space<vmem>>, %arg4: memref<32x4096xf32, #tpu.memory_space<vmem>>) attributes {dimension_semantics = [#tpu.dimension_semantics<arbitrary>], iteration_bounds = array<i64: 1>, scalar_prefetch = 0 : i64, scratch_operands = 0 : i64, tpu.core_type = #tpu.core_type<tc>, window_params = [{pipeline_mode = #tpu.pipeline_mode<synchronous>, transform_indices = @transform_0, window_bounds = array<i64: 32, 144>}, {pipeline_mode = #tpu.pipeline_mode<synchronous>, transform_indices = @transform_1, window_bounds = array<i64: 144, 4096>}, {pipeline_mode = #tpu.pipeline_mode<synchronous>, transform_indices = @transform_2, window_bounds = array<i64: 1, 4096>}, {pipeline_mode = #tpu.pipeline_mode<synchronous>, transform_indices = @transform_3, window_bounds = array<i64: 32, 4096>}]} {
    %c0 = arith.constant 0 : index
    %c0_0 = arith.constant 0 : index
    %0 = vector.load %arg1[%c0, %c0_0] : memref<32x144xf32, #tpu.memory_space<vmem>>, vector<32x144xf32>
    %c0_1 = arith.constant 0 : index
    %c0_2 = arith.constant 0 : index
    %1 = vector.load %arg2[%c0_1, %c0_2] : memref<144x4096xf32, #tpu.memory_space<vmem>>, vector<144x4096xf32>
    %cst = arith.constant dense<0.000000e+00> : vector<32x4096xf32>
    %2 = tpu.matmul %0, %1, %cst {dimension_numbers = #tpu.dot_dimension_numbers<[1], [0], [0], [1], [0, 0, 1, 1], [], []>} : vector<32x144xf32>, vector<144x4096xf32>, vector<32x4096xf32> -> vector<32x4096xf32>
    %c0_3 = arith.constant 0 : index
    %c0_4 = arith.constant 0 : index
    %3 = vector.load %arg3[%c0_3, %c0_4] : memref<1x4096xf32, #tpu.memory_space<vmem>>, vector<1x4096xf32>
    %4 = vector.broadcast %3 : vector<1x4096xf32> to vector<32x4096xf32>
    %5 = arith.addf %2, %4 : vector<32x4096xf32>
    %c0_5 = arith.constant 0 : index
    %c0_6 = arith.constant 0 : index
    %6 = vector.load %arg4[%c0_5, %c0_6] : memref<32x4096xf32, #tpu.memory_space<vmem>>, vector<32x4096xf32>
    tpu.vector_store %arg4[%c0_5, %c0_6], %5 {strides = array<i32>} : memref<32x4096xf32, #tpu.memory_space<vmem>>, vector<32x4096xf32>,
    return
  }
  func.func @transform_0(%arg0: i32) -> (i32, i32) {
    %c0_i32 = arith.constant 0 : i32
    %c0_i32_0 = arith.constant 0 : i32
    %c0_i32_1 = arith.constant 0 : i32
    return %c0_i32, %c0_i32_0 : i32, i32
  }
  func.func @transform_1(%arg0: i32) -> (i32, i32) {
    %c0_i32 = arith.constant 0 : i32
    %c0_i32_0 = arith.constant 0 : i32
    %c0_i32_1 = arith.constant 0 : i32
    return %c0_i32, %c0_i32_0 : i32, i32
  }
  func.func @transform_2(%arg0: i32) -> (i32, i32) {
    %c0_i32 = arith.constant 0 : i32
    %c0_i32_0 = arith.constant 0 : i32
    %c0_i32_1 = arith.constant 0 : i32
    return %c0_i32, %c0_i32_0 : i32, i32
  }
  func.func @transform_3(%arg0: i32) -> (i32, i32) {
    %c0_i32 = arith.constant 0 : i32
    %c0_i32_0 = arith.constant 0 : i32
    %c0_i32_1 = arith.constant 0 : i32
    return %c0_i32, %c0_i32_0 : i32, i32
  }
}

</mosaic_0001>

<llo_original>
// kernel: forward.1
$region0: #{forward.1}
  #allocation0 [shape = 'u32[]', space=smem, size = 0x4, offset = 0x4, fixed_abs, tag = 'smem constant byte address 0x4 - core index']
  #allocation1 [shape = 'u32[144,128]{1,0:T(1,128)}', space=vmem, size = 0x12000, scoped, tag = 'internal scratch']
  %s0 = inlined_call_operand.vmem [shape: f32[32,144], index: 0, kind: input, shape index: {}]
  %s1 = inlined_call_operand.hbm [shape: f32[144,4096], index: 1, kind: input, shape index: {}]
  %s2 = inlined_call_operand.hbm [shape: f32[1,4096], index: 2, kind: input, shape index: {}]
  %s3 = inlined_call_operand.vmem [shape: f32[32,4096], index: 3, kind: output, shape index: {}]
  %s4 = sld [smem:[#allocation0]]
  $region30: #{forward.1} parent=0
    _
  %s6 = ssub.s32 1, %s4
  %s7 = scalar_select 0, %s6, %s4
  $region1: #{forward.1} parent=0
    #allocation2 [shape = 'u8[2359296]{0}', space=vmem, size = 0x240000, scoped, tag = 'input window, operand 1, single buffered']
    #allocation3 [shape = 's32[1]{0}', space=sflag, size = 0x4, scoped, tag = 'scoped memory for forward.1']
    #allocation4 [shape = 'u8[16384]{0}', space=vmem, size = 0x4000, scoped, tag = 'input window, operand 2, single buffered']
    #allocation5 [shape = 's32[1]{0}', space=sflag, size = 0x4, scoped, tag = 'scoped memory for forward.1']
    %8 = vsyncpa [#allocation3], 0
    %9 = vsyncpa [#allocation5], 0
    // Predicated region
    $region2: #{forward.1} parent=1 // pred_check
      _
    $region3: #{forward.1} parent=1 // pred_check_branch
      %11 = sbr.rel (0) target = $region5
    $region4: #{forward.1} parent=1 // pred_region
      _
    $region5: #{forward.1} parent=1 // pred_fallthru
      _
    // Predicated region
    $region6: #{forward.1} parent=1 // pred_check
      _
    $region7: #{forward.1} parent=1 // pred_check_branch
      %13 = sbr.rel (0) target = $region9
    $region8: #{forward.1} parent=1 // pred_region
      %s15 = ssub.s32 73728, 73728
      %16 = vsyncadd [#allocation3], %s15
      %s17 = sshll.u32 [#allocation2], 4
      %s18 = int_to_ptr.vmem [resolvable:$true] %s17
      %23 = dma.hbm_to_vmem [thread:$0]  %s1, 73728, %s18, [#allocation3], 4096, 4096, 256
    $region9: #{forward.1} parent=1 // pred_fallthru
      _
    // Predicated region
    $region10: #{forward.1} parent=1 // pred_check
      _
    $region11: #{forward.1} parent=1 // pred_check_branch
      %25 = sbr.rel (0) target = $region13
    $region12: #{forward.1} parent=1 // pred_region
      %s27 = ssub.s32 512, 512
      %28 = vsyncadd [#allocation5], %s27
      %s30 = sshll.u32 [#allocation4], 4
      %s31 = int_to_ptr.vmem [resolvable:$true] %s30
      %33 = dma.hbm_to_vmem [thread:$0]  %s2, 512, %s31, [#allocation5]
    $region13: #{forward.1} parent=1 // pred_fallthru
      _
    // Predicated region
    $region14: #{forward.1} parent=1 // pred_check
      _
    $region15: #{forward.1} parent=1 // pred_check_branch
      %35 = sbr.rel (0) target = $region17
    $region16: #{forward.1} parent=1 // pred_region
      %36 = dma.done [#allocation3], 73728
    $region17: #{forward.1} parent=1 // pred_fallthru
      _
    // Predicated region
    $region18: #{forward.1} parent=1 // pred_check
      _
    $region19: #{forward.1} parent=1 // pred_check_branch
      %38 = sbr.rel (0) target = $region21
    $region20: #{forward.1} parent=1 // pred_region
      %39 = dma.done [#allocation5], 512
    $region21: #{forward.1} parent=1 // pred_fallthru
      _
    %v40 = vld [vmem:[%s0] sm:$0xff]
    %v41 = vld [vmem:[%s0 + $0x8] sm:$0xff]
    %v42 = vld [vmem:[%s0 + $0x10] sm:$0xff]
    %v43 = vld [vmem:[%s0 + $0x18] sm:$0xff]
    %v44 = vld [vmem:[%s0 + $0x20] sm:$0xff]
    %v45 = vld [vmem:[%s0 + $0x28] sm:$0xff]
    %v46 = vld [vmem:[%s0 + $0x30] sm:$0xff]
    %v47 = vld [vmem:[%s0 + $0x38] sm:$0xff]
    %v48 = vld [vmem:[#allocation2] sm:$0xff]
    %v49 = vld [vmem:[#allocation2 + $0x8] sm:$0xff]
    %v50 = vld [vmem:[#allocation2 + $0x10] sm:$0xff]
    %v51 = vld [vmem:[#allocation2 + $0x18] sm:$0xff]
    %v52 = vld [vmem:[#allocation2 + $0x20] sm:$0xff]
    %v53 = vld [vmem:[#allocation2 + $0x28] sm:$0xff]
    %v54 = vld [vmem:[#allocation2 + $0x30] sm:$0xff]
    %v55 = vld [vmem:[#allocation2 + $0x38] sm:$0xff]
    %v56 = vld [vmem:[#allocation2 + $0x40] sm:$0xff]
    %v57 = vld [vmem:[#allocation2 + $0x48] sm:$0xff]
    %v58 = vld [vmem:[#allocation2 + $0x50] sm:$0xff]
    %v59 = vld [vmem:[#allocation2 + $0x58] sm:$0xff]
    %v60 = vld [vmem:[#allocation2 + $0x60] sm:$0xff]
    %v61 = vld [vmem:[#allocation2 + $0x68] sm:$0xff]
    %v62 = vld [vmem:[#allocation2 + $0x70] sm:$0xff]
    %v63 = vld [vmem:[#allocation2 + $0x78] sm:$0xff]
    %v64 = vld [vmem:[#allocation2 + $0x80] sm:$0xff]
    %v65 = vld [vmem:[#allocation2 + $0x88] sm:$0xff]
    %v66 = vld [vmem:[#allocation2 + $0x90] sm:$0xff]
    %v67 = vld [vmem:[#allocation2 + $0x98] sm:$0xff]
    %v68 = vld [vmem:[#allocation2 + $0xa0] sm:$0xff]
    %v69 = vld [vmem:[#allocation2 + $0xa8] sm:$0xff]
    %v70 = vld [vmem:[#allocation2 + $0xb0] sm:$0xff]
    %v71 = vld [vmem:[#allocation2 + $0xb8] sm:$0xff]
    %v72 = vld [vmem:[#allocation2 + $0xc0] sm:$0xff]
    %v73 = vld [vmem:[#allocation2 + $0xc8] sm:$0xff]
    %v74 = vld [vmem:[#allocation2 + $0xd0] sm:$0xff]
    %v75 = vld [vmem:[#allocation2 + $0xd8] sm:$0xff]
    %v76 = vld [vmem:[#allocation2 + $0xe0] sm:$0xff]
    %v77 = vld [vmem:[#allocation2 + $0xe8] sm:$0xff]
    %v78 = vld [vmem:[#allocation2 + $0xf0] sm:$0xff]
    %v79 = vld [vmem:[#allocation2 + $0xf8] sm:$0xff]
    %v80 = vld [vmem:[#allocation2 + $0x100] sm:$0xff]
    %v81 = vld [vmem:[#allocation2 + $0x108] sm:$0xff]
    %v82 = vld [vmem:[#allocation2 + $0x110] sm:$0xff]
    %v83 = vld [vmem:[#allocation2 + $0x118] sm:$0xff]
    %v84 = vld [vmem:[#allocation2 + $0x120] sm:$0xff]
    %v85 = vld [vmem:[#allocation2 + $0x128] sm:$0xff]
    %v86 = vld [vmem:[#allocation2 + $0x130] sm:$0xff]
    %v87 = vld [vmem:[#allocation2 + $0x138] sm:$0xff]
    %v88 = vld [vmem:[#allocation2 + $0x140] sm:$0xff]
    %v89 = vld [vmem:[#allocation2 + $0x148] sm:$0xff]
    %v90 = vld [vmem:[#allocation2 + $0x150] sm:$0xff]
    %v91 = vld [vmem:[#allocation2 + $0x158] sm:$0xff]
    %v92 = vld [vmem:[#allocation2 + $0x160] sm:$0xff]
    %v93 = vld [vmem:[#allocation2 + $0x168] sm:$0xff]
    %v94 = vld [vmem:[#allocation2 + $0x170] sm:$0xff]
    %v95 = vld [vmem:[#allocation2 + $0x178] sm:$0xff]
    %v96 = vld [vmem:[#allocation2 + $0x180] sm:$0xff]
    %v97 = vld [vmem:[#allocation2 + $0x188] sm:$0xff]
    %v98 = vld [vmem:[#allocation2 + $0x190] sm:$0xff]
    %v99 = vld [vmem:[#allocation2 + $0x198] sm:$0xff]
    %v100 = vld [vmem:[#allocation2 + $0x1a0] sm:$0xff]
    %v101 = vld [vmem:[#allocation2 + $0x1a8] sm:$0xff]
    %v102 = vld [vmem:[#allocation2 + $0x1b0] sm:$0xff]
    %v103 = vld [vmem:[#allocation2 + $0x1b8] sm:$0xff]
    %v104 = vld [vmem:[#allocation2 + $0x1c0] sm:$0xff]
    %v105 = vld [vmem:[#allocation2 + $0x1c8] sm:$0xff]
    %v106 = vld [vmem:[#allocation2 + $0x1d0] sm:$0xff]
    %v107 = vld [vmem:[#allocation2 + $0x1d8] sm:$0xff]
    %v108 = vld [vmem:[#allocation2 + $0x1e0] sm:$0xff]
    %v109 = vld [vmem:[#allocation2 + $0x1e8] sm:$0xff]
    %v110 = vld [vmem:[#allocation2 + $0x1f0] sm:$0xff]
    %v111 = vld [vmem:[#allocation2 + $0x1f8] sm:$0xff]
    %v112 = vld [vmem:[#allocation2 + $0x200] sm:$0xff]
    %v113 = vld [vmem:[#allocation2 + $0x208] sm:$0xff]
    %v114 = vld [vmem:[#allocation2 + $0x210] sm:$0xff]
    %v115 = vld [vmem:[#allocation2 + $0x218] sm:$0xff]
    %v116 = vld [vmem:[#allocation2 + $0x220] sm:$0xff]
    %v117 = vld [vmem:[#allocation2 + $0x228] sm:$0xff]
    %v118 = vld [vmem:[#allocation2 + $0x230] sm:$0xff]
    %v119 = vld [vmem:[#allocation2 + $0x238] sm:$0xff]
    %v120 = vld [vmem:[#allocation2 + $0x240] sm:$0xff]
    %v121 = vld [vmem:[#allocation2 + $0x248] sm:$0xff]
    %v122 = vld [vmem:[#allocation2 + $0x250] sm:$0xff]
    %v123 = vld [vmem:[#allocation2 + $0x258] sm:$0xff]
    %v124 = vld [vmem:[#allocation2 + $0x260] sm:$0xff]
    %v125 = vld [vmem:[#allocation2 + $0x268] sm:$0xff]
    %v126 = vld [vmem:[#allocation2 + $0x270] sm:$0xff]
    %v127 = vld [vmem:[#allocation2 + $0x278] sm:$0xff]
    %v128 = vld [vmem:[#allocation2 + $0x280] sm:$0xff]
    %v129 = vld [vmem:[#allocation2 + $0x288] sm:$0xff]
    %v130 = vld [vmem:[#allocation2 + $0x290] sm:$0xff]
    %v131 = vld [vmem:[#allocation2 + $0x298] sm:$0xff]
    %v132 = vld [vmem:[#allocation2 + $0x2a0] sm:$0xff]
    %v133 = vld [vmem:[#allocation2 + $0x2a8] sm:$0xff]
    %v134 = vld [vmem:[#allocation2 + $0x2b0] sm:$0xff]
    %v135 = vld [vmem:[#allocation2 + $0x2b8] sm:$0xff]
    %v136 = vld [vmem:[#allocation2 + $0x2c0] sm:$0xff]
    %v137 = vld [vmem:[#allocation2 + $0x2c8] sm:$0xff]
    %v138 = vld [vmem:[#allocation2 + $0x2d0] sm:$0xff]
    %v139 = vld [vmem:[#allocation2 + $0x2d8] sm:$0xff]
    %v140 = vld [vmem:[#allocation2 + $0x2e0] sm:$0xff]
    %v141 = vld [vmem:[#allocation2 + $0x2e8] sm:$0xff]
    %v142 = vld [vmem:[#allocation2 + $0x2f0] sm:$0xff]
    %v143 = vld [vmem:[#allocation2 + $0x2f8] sm:$0xff]
    %v144 = vld [vmem:[#allocation2 + $0x300] sm:$0xff]
    %v145 = vld [vmem:[#allocation2 + $0x308] sm:$0xff]
    %v146 = vld [vmem:[#allocation2 + $0x310] sm:$0xff]
    %v147 = vld [vmem:[#allocation2 + $0x318] sm:$0xff]
    %v148 = vld [vmem:[#allocation2 + $0x320] sm:$0xff]
    %v149 = vld [vmem:[#allocation2 + $0x328] sm:$0xff]
    %v150 = vld [vmem:[#allocation2 + $0x330] sm:$0xff]
    %v151 = vld [vmem:[#allocation2 + $0x338] sm:$0xff]
    %v152 = vld [vmem:[#allocation2 + $0x340] sm:$0xff]
    %v153 = vld [vmem:[#allocation2 + $0x348] sm:$0xff]
    %v154 = vld [vmem:[#allocation2 + $0x350] sm:$0xff]
    %v155 = vld [vmem:[#allocation2 + $0x358] sm:$0xff]
    %v156 = vld [vmem:[#allocation2 + $0x360] sm:$0xff]
    %v157 = vld [vmem:[#allocation2 + $0x368] sm:$0xff]
    %v158 = vld [vmem:[#allocation2 + $0x370] sm:$0xff]
    %v159 = vld [vmem:[#allocation2 + $0x378] sm:$0xff]
    %v160 = vld [vmem:[#allocation2 + $0x380] sm:$0xff]
    %v161 = vld [vmem:[#allocation2 + $0x388] sm:$0xff]
    %v162 = vld [vmem:[#allocation2 + $0x390] sm:$0xff]
    %v163 = vld [vmem:[#allocation2 + $0x398] sm:$0xff]
    %v164 = vld [vmem:[#allocation2 + $0x3a0] sm:$0xff]
    %v165 = vld [vmem:[#allocation2 + $0x3a8] sm:$0xff]
    %v166 = vld [vmem:[#allocation2 + $0x3b0] sm:$0xff]
    %v167 = vld [vmem:[#allocation2 + $0x3b8] sm:$0xff]
    %v168 = vld [vmem:[#allocation2 + $0x3c0] sm:$0xff]
    %v169 = vld [vmem:[#allocation2 + $0x3c8] sm:$0xff]
    %v170 = vld [vmem:[#allocation2 + $0x3d0] sm:$0xff]
    %v171 = vld [vmem:[#allocation2 + $0x3d8] sm:$0xff]
    %v172 = vld [vmem:[#allocation2 + $0x3e0] sm:$0xff]
    %v173 = vld [vmem:[#allocation2 + $0x3e8] sm:$0xff]
    %v174 = vld [vmem:[#allocation2 + $0x3f0] sm:$0xff]
    %v175 = vld [vmem:[#allocation2 + $0x3f8] sm:$0xff]
    %v176 = vld [vmem:[#allocation2 + $0x400] sm:$0xff]
    %v177 = vld [vmem:[#allocation2 + $0x408] sm:$0xff]
    %v178 = vld [vmem:[#allocation2 + $0x410] sm:$0xff]
    %v179 = vld [vmem:[#allocation2 + $0x418] sm:$0xff]
    %v180 = vld [vmem:[#allocation2 + $0x420] sm:$0xff]
    %v181 = vld [vmem:[#allocation2 + $0x428] sm:$0xff]
    %v182 = vld [vmem:[#allocation2 + $0x430] sm:$0xff]
    %v183 = vld [vmem:[#allocation2 + $0x438] sm:$0xff]
    %v184 = vld [vmem:[#allocation2 + $0x440] sm:$0xff]
    %v185 = vld [vmem:[#allocation2 + $0x448] sm:$0xff]
    %v186 = vld [vmem:[#allocation2 + $0x450] sm:$0xff]
    %v187 = vld [vmem:[#allocation2 + $0x458] sm:$0xff]
    %v188 = vld [vmem:[#allocation2 + $0x460] sm:$0xff]
    %v189 = vld [vmem:[#allocation2 + $0x468] sm:$0xff]
    %v190 = vld [vmem:[#allocation2 + $0x470] sm:$0xff]
    %v191 = vld [vmem:[#allocation2 + $0x478] sm:$0xff]
    %v192 = vld [vmem:[#allocation2 + $0x480] sm:$0xff]
    %v193 = vld [vmem:[#allocation2 + $0x488] sm:$0xff]
    %v194 = vld [vmem:[#allocation2 + $0x490] sm:$0xff]
    %v195 = vld [vmem:[#allocation2 + $0x498] sm:$0xff]
    %v196 = vld [vmem:[#allocation2 + $0x4a0] sm:$0xff]
    %v197 = vld [vmem:[#allocation2 + $0x4a8] sm:$0xff]
    %v198 = vld [vmem:[#allocation2 + $0x4b0] sm:$0xff]
    %v199 = vld [vmem:[#allocation2 + $0x4b8] sm:$0xff]
    %v200 = vld [vmem:[#allocation2 + $0x4c0] sm:$0xff]
    %v201 = vld [vmem:[#allocation2 + $0x4c8] sm:$0xff]
    %v202 = vld [vmem:[#allocation2 + $0x4d0] sm:$0xff]
    %v203 = vld [vmem:[#allocation2 + $0x4d8] sm:$0xff]
    %v204 = vld [vmem:[#allocation2 + $0x4e0] sm:$0xff]
    %v205 = vld [vmem:[#allocation2 + $0x4e8] sm:$0xff]
    %v206 = vld [vmem:[#allocation2 + $0x4f0] sm:$0xff]
    %v207 = vld [vmem:[#allocation2 + $0x4f8] sm:$0xff]
    %v208 = vld [vmem:[#allocation2 + $0x500] sm:$0xff]
    %v209 = vld [vmem:[#allocation2 + $0x508] sm:$0xff]
    %v210 = vld [vmem:[#allocation2 + $0x510] sm:$0xff]
    %v211 = vld [vmem:[#allocation2 + $0x518] sm:$0xff]
    %v212 = vld [vmem:[#allocation2 + $0x520] sm:$0xff]
    %v213 = vld [vmem:[#allocation2 + $0x528] sm:$0xff]
    %v214 = vld [vmem:[#allocation2 + $0x530] sm:$0xff]
    %v215 = vld [vmem:[#allocation2 + $0x538] sm:$0xff]
    %v216 = vld [vmem:[#allocation2 + $0x540] sm:$0xff]
    %v217 = vld [vmem:[#allocation2 + $0x548] sm:$0xff]
    %v218 = vld [vmem:[#allocation2 + $0x550] sm:$0xff]
    %v219 = vld [vmem:[#allocation2 + $0x558] sm:$0xff]
    %v220 = vld [vmem:[#allocation2 + $0x560] sm:$0xff]
    %v221 = vld [vmem:[#allocation2 + $0x568] sm:$0xff]
    %v222 = vld [vmem:[#allocation2 + $0x570] sm:$0xff]
    %v223 = vld [vmem:[#allocation2 + $0x578] sm:$0xff]
    %v224 = vld [vmem:[#allocation2 + $0x580] sm:$0xff]
    %v225 = vld [vmem:[#allocation2 + $0x588] sm:$0xff]
    %v226 = vld [vmem:[#allocation2 + $0x590] sm:$0xff]
    %v227 = vld [vmem:[#allocation2 + $0x598] sm:$0xff]
    %v228 = vld [vmem:[#allocation2 + $0x5a0] sm:$0xff]
    %v229 = vld [vmem:[#allocation2 + $0x5a8] sm:$0xff]
    %v230 = vld [vmem:[#allocation2 + $0x5b0] sm:$0xff]
    %v231 = vld [vmem:[#allocation2 + $0x5b8] sm:$0xff]
    %v232 = vld [vmem:[#allocation2 + $0x5c0] sm:$0xff]
    %v233 = vld [vmem:[#allocation2 + $0x5c8] sm:$0xff]
    %v234 = vld [vmem:[#allocation2 + $0x5d0] sm:$0xff]
    %v235 = vld [vmem:[#allocation2 + $0x5d8] sm:$0xff]
    %v236 = vld [vmem:[#allocation2 + $0x5e0] sm:$0xff]
    %v237 = vld [vmem:[#allocation2 + $0x5e8] sm:$0xff]
    %v238 = vld [vmem:[#allocation2 + $0x5f0] sm:$0xff]
    %v239 = vld [vmem:[#allocation2 + $0x5f8] sm:$0xff]
    %v240 = vld [vmem:[#allocation2 + $0x600] sm:$0xff]
    %v241 = vld [vmem:[#allocation2 + $0x608] sm:$0xff]
    %v242 = vld [vmem:[#allocation2 + $0x610] sm:$0xff]
    %v243 = vld [vmem:[#allocation2 + $0x618] sm:$0xff]
    %v244 = vld [vmem:[#allocation2 + $0x620] sm:$0xff]
    %v245 = vld [vmem:[#allocation2 + $0x628] sm:$0xff]
    %v246 = vld [vmem:[#allocation2 + $0x630] sm:$0xff]
    %v247 = vld [vmem:[#allocation2 + $0x638] sm:$0xff]
    %v248 = vld [vmem:[#allocation2 + $0x640] sm:$0xff]
    %v249 = vld [vmem:[#allocation2 + $0x648] sm:$0xff]
    %v250 = vld [vmem:[#allocation2 + $0x650] sm:$0xff]
    %v251 = vld [vmem:[#allocation2 + $0x658] sm:$0xff]
    %v252 = vld [vmem:[#allocation2 + $0x660] sm:$0xff]
    %v253 = vld [vmem:[#allocation2 + $0x668] sm:$0xff]
    %v254 = vld [vmem:[#allocation2 + $0x670] sm:$0xff]
    %v255 = vld [vmem:[#allocation2 + $0x678] sm:$0xff]
    %v256 = vld [vmem:[#allocation2 + $0x680] sm:$0xff]
    %v257 = vld [vmem:[#allocation2 + $0x688] sm:$0xff]
    %v258 = vld [vmem:[#allocation2 + $0x690] sm:$0xff]
    %v259 = vld [vmem:[#allocation2 + $0x698] sm:$0xff]
    %v260 = vld [vmem:[#allocation2 + $0x6a0] sm:$0xff]
    %v261 = vld [vmem:[#allocation2 + $0x6a8] sm:$0xff]
    %v262 = vld [vmem:[#allocation2 + $0x6b0] sm:$0xff]
    %v263 = vld [vmem:[#allocation2 + $0x6b8] sm:$0xff]
    %v264 = vld [vmem:[#allocation2 + $0x6c0] sm:$0xff]
    %v265 = vld [vmem:[#allocation2 + $0x6c8] sm:$0xff]
    %v266 = vld [vmem:[#allocation2 + $0x6d0] sm:$0xff]
    %v267 = vld [vmem:[#allocation2 + $0x6d8] sm:$0xff]
    %v268 = vld [vmem:[#allocation2 + $0x6e0] sm:$0xff]
    %v269 = vld [vmem:[#allocation2 + $0x6e8] sm:$0xff]
    %v270 = vld [vmem:[#allocation2 + $0x6f0] sm:$0xff]
    %v271 = vld [vmem:[#allocation2 + $0x6f8] sm:$0xff]
    %v272 = vld [vmem:[#allocation2 + $0x700] sm:$0xff]
    %v273 = vld [vmem:[#allocation2 + $0x708] sm:$0xff]
    %v274 = vld [vmem:[#allocation2 + $0x710] sm:$0xff]
    %v275 = vld [vmem:[#allocation2 + $0x718] sm:$0xff]
    %v276 = vld [vmem:[#allocation2 + $0x720] sm:$0xff]
    %v277 = vld [vmem:[#allocation2 + $0x728] sm:$0xff]
    %v278 = vld [vmem:[#allocation2 + $0x730] sm:$0xff]
    %v279 = vld [vmem:[#allocation2 + $0x738] sm:$0xff]
    %v280 = vld [vmem:[#allocation2 + $0x740] sm:$0xff]
    %v281 = vld [vmem:[#allocation2 + $0x748] sm:$0xff]
    %v282 = vld [vmem:[#allocation2 + $0x750] sm:$0xff]
    %v283 = vld [vmem:[#allocation2 + $0x758] sm:$0xff]
    %v284 = vld [vmem:[#allocation2 + $0x760] sm:$0xff]
    %v285 = vld [vmem:[#allocation2 + $0x768] sm:$0xff]
    %v286 = vld [vmem:[#allocation2 + $0x770] sm:$0xff]
    %v287 = vld [vmem:[#allocation2 + $0x778] sm:$0xff]
    %v288 = vld [vmem:[#allocation2 + $0x780] sm:$0xff]
    %v289 = vld [vmem:[#allocation2 + $0x788] sm:$0xff]
    %v290 = vld [vmem:[#allocation2 + $0x790] sm:$0xff]
    %v291 = vld [vmem:[#allocation2 + $0x798] sm:$0xff]
    %v292 = vld [vmem:[#allocation2 + $0x7a0] sm:$0xff]
    %v293 = vld [vmem:[#allocation2 + $0x7a8] sm:$0xff]
    %v294 = vld [vmem:[#allocation2 + $0x7b0] sm:$0xff]
    %v295 = vld [vmem:[#allocation2 + $0x7b8] sm:$0xff]
    %v296 = vld [vmem:[#allocation2 + $0x7c0] sm:$0xff]
    %v297 = vld [vmem:[#allocation2 + $0x7c8] sm:$0xff]
    %v298 = vld [vmem:[#allocation2 + $0x7d0] sm:$0xff]
    %v299 = vld [vmem:[#allocation2 + $0x7d8] sm:$0xff]
    %v300 = vld [vmem:[#allocation2 + $0x7e0] sm:$0xff]
    %v301 = vld [vmem:[#allocation2 + $0x7e8] sm:$0xff]
    %v302 = vld [vmem:[#allocation2 + $0x7f0] sm:$0xff]
    %v303 = vld [vmem:[#allocation2 + $0x7f8] sm:$0xff]
    %v304 = vld [vmem:[#allocation2 + $0x800] sm:$0xff]
    %v305 = vld [vmem:[#allocation2 + $0x808] sm:$0xff]
    %v306 = vld [vmem:[#allocation2 + $0x810] sm:$0xff]
    %v307 = vld [vmem:[#allocation2 + $0x818] sm:$0xff]
    %v308 = vld [vmem:[#allocation2 + $0x820] sm:$0xff]
    %v309 = vld [vmem:[#allocation2 + $0x828] sm:$0xff]
    %v310 = vld [vmem:[#allocation2 + $0x830] sm:$0xff]
    %v311 = vld [vmem:[#allocation2 + $0x838] sm:$0xff]
    %v312 = vld [vmem:[#allocation2 + $0x840] sm:$0xff]
    %v313 = vld [vmem:[#allocation2 + $0x848] sm:$0xff]
    %v314 = vld [vmem:[#allocation2 + $0x850] sm:$0xff]
    %v315 = vld [vmem:[#allocation2 + $0x858] sm:$0xff]
    %v316 = vld [vmem:[#allocation2 + $0x860] sm:$0xff]
    %v317 = vld [vmem:[#allocation2 + $0x868] sm:$0xff]
    %v318 = vld [vmem:[#allocation2 + $0x870] sm:$0xff]
    %v319 = vld [vmem:[#allocation2 + $0x878] sm:$0xff]
    %v320 = vld [vmem:[#allocation2 + $0x880] sm:$0xff]
    %v321 = vld [vmem:[#allocation2 + $0x888] sm:$0xff]
    %v322 = vld [vmem:[#allocation2 + $0x890] sm:$0xff]
    %v323 = vld [vmem:[#allocation2 + $0x898] sm:$0xff]
    %v324 = vld [vmem:[#allocation2 + $0x8a0] sm:$0xff]
    %v325 = vld [vmem:[#allocation2 + $0x8a8] sm:$0xff]
    %v326 = vld [vmem:[#allocation2 + $0x8b0] sm:$0xff]
    %v327 = vld [vmem:[#allocation2 + $0x8b8] sm:$0xff]
    %v328 = vld [vmem:[#allocation2 + $0x8c0] sm:$0xff]
    %v329 = vld [vmem:[#allocation2 + $0x8c8] sm:$0xff]
    %v330 = vld [vmem:[#allocation2 + $0x8d0] sm:$0xff]
    %v331 = vld [vmem:[#allocation2 + $0x8d8] sm:$0xff]
    %v332 = vld [vmem:[#allocation2 + $0x8e0] sm:$0xff]
    %v333 = vld [vmem:[#allocation2 + $0x8e8] sm:$0xff]
    %v334 = vld [vmem:[#allocation2 + $0x8f0] sm:$0xff]
    %v335 = vld [vmem:[#allocation2 + $0x8f8] sm:$0xff]
    %v336 = vld [vmem:[#allocation2 + $0x900] sm:$0xff]
    %v337 = vld [vmem:[#allocation2 + $0x908] sm:$0xff]
    %v338 = vld [vmem:[#allocation2 + $0x910] sm:$0xff]
    %v339 = vld [vmem:[#allocation2 + $0x918] sm:$0xff]
    %v340 = vld [vmem:[#allocation2 + $0x920] sm:$0xff]
    %v341 = vld [vmem:[#allocation2 + $0x928] sm:$0xff]
    %v342 = vld [vmem:[#allocation2 + $0x930] sm:$0xff]
    %v343 = vld [vmem:[#allocation2 + $0x938] sm:$0xff]
    %v344 = vld [vmem:[#allocation2 + $0x940] sm:$0xff]
    %v345 = vld [vmem:[#allocation2 + $0x948] sm:$0xff]
    %v346 = vld [vmem:[#allocation2 + $0x950] sm:$0xff]
    %v347 = vld [vmem:[#allocation2 + $0x958] sm:$0xff]
    %v348 = vld [vmem:[#allocation2 + $0x960] sm:$0xff]
    %v349 = vld [vmem:[#allocation2 + $0x968] sm:$0xff]
    %v350 = vld [vmem:[#allocation2 + $0x970] sm:$0xff]
    %v351 = vld [vmem:[#allocation2 + $0x978] sm:$0xff]
    %v352 = vld [vmem:[#allocation2 + $0x980] sm:$0xff]
    %v353 = vld [vmem:[#allocation2 + $0x988] sm:$0xff]
    %v354 = vld [vmem:[#allocation2 + $0x990] sm:$0xff]
    %v355 = vld [vmem:[#allocation2 + $0x998] sm:$0xff]
    %v356 = vld [vmem:[#allocation2 + $0x9a0] sm:$0xff]
    %v357 = vld [vmem:[#allocation2 + $0x9a8] sm:$0xff]
    %v358 = vld [vmem:[#allocation2 + $0x9b0] sm:$0xff]
    %v359 = vld [vmem:[#allocation2 + $0x9b8] sm:$0xff]
    %v360 = vld [vmem:[#allocation2 + $0x9c0] sm:$0xff]
    %v361 = vld [vmem:[#allocation2 + $0x9c8] sm:$0xff]
    %v362 = vld [vmem:[#allocation2 + $0x9d0] sm:$0xff]
    %v363 = vld [vmem:[#allocation2 + $0x9d8] sm:$0xff]
    %v364 = vld [vmem:[#allocation2 + $0x9e0] sm:$0xff]
    %v365 = vld [vmem:[#allocation2 + $0x9e8] sm:$0xff]
    %v366 = vld [vmem:[#allocation2 + $0x9f0] sm:$0xff]
    %v367 = vld [vmem:[#allocation2 + $0x9f8] sm:$0xff]
    %v368 = vld [vmem:[#allocation2 + $0xa00] sm:$0xff]
    %v369 = vld [vmem:[#allocation2 + $0xa08] sm:$0xff]
    %v370 = vld [vmem:[#allocation2 + $0xa10] sm:$0xff]
    %v371 = vld [vmem:[#allocation2 + $0xa18] sm:$0xff]
    %v372 = vld [vmem:[#allocation2 + $0xa20] sm:$0xff]
    %v373 = vld [vmem:[#allocation2 + $0xa28] sm:$0xff]
    %v374 = vld [vmem:[#allocation2 + $0xa30] sm:$0xff]
    %v375 = vld [vmem:[#allocation2 + $0xa38] sm:$0xff]
    %v376 = vld [vmem:[#allocation2 + $0xa40] sm:$0xff]
    %v377 = vld [vmem:[#allocation2 + $0xa48] sm:$0xff]
    %v378 = vld [vmem:[#allocation2 + $0xa50] sm:$0xff]
    %v379 = vld [vmem:[#allocation2 + $0xa58] sm:$0xff]
    %v380 = vld [vmem:[#allocation2 + $0xa60] sm:$0xff]
    %v381 = vld [vmem:[#allocation2 + $0xa68] sm:$0xff]
    %v382 = vld [vmem:[#allocation2 + $0xa70] sm:$0xff]
    %v383 = vld [vmem:[#allocation2 + $0xa78] sm:$0xff]
    %v384 = vld [vmem:[#allocation2 + $0xa80] sm:$0xff]
    %v385 = vld [vmem:[#allocation2 + $0xa88] sm:$0xff]
    %v386 = vld [vmem:[#allocation2 + $0xa90] sm:$0xff]
    %v387 = vld [vmem:[#allocation2 + $0xa98] sm:$0xff]
    %v388 = vld [vmem:[#allocation2 + $0xaa0] sm:$0xff]
    %v389 = vld [vmem:[#allocation2 + $0xaa8] sm:$0xff]
    %v390 = vld [vmem:[#allocation2 + $0xab0] sm:$0xff]
    %v391 = vld [vmem:[#allocation2 + $0xab8] sm:$0xff]
    %v392 = vld [vmem:[#allocation2 + $0xac0] sm:$0xff]
    %v393 = vld [vmem:[#allocation2 + $0xac8] sm:$0xff]
    %v394 = vld [vmem:[#allocation2 + $0xad0] sm:$0xff]
    %v395 = vld [vmem:[#allocation2 + $0xad8] sm:$0xff]
    %v396 = vld [vmem:[#allocation2 + $0xae0] sm:$0xff]
    %v397 = vld [vmem:[#allocation2 + $0xae8] sm:$0xff]
    %v398 = vld [vmem:[#allocation2 + $0xaf0] sm:$0xff]
    %v399 = vld [vmem:[#allocation2 + $0xaf8] sm:$0xff]
    %v400 = vld [vmem:[#allocation2 + $0xb00] sm:$0xff]
    %v401 = vld [vmem:[#allocation2 + $0xb08] sm:$0xff]
    %v402 = vld [vmem:[#allocation2 + $0xb10] sm:$0xff]
    %v403 = vld [vmem:[#allocation2 + $0xb18] sm:$0xff]
    %v404 = vld [vmem:[#allocation2 + $0xb20] sm:$0xff]
    %v405 = vld [vmem:[#allocation2 + $0xb28] sm:$0xff]
    %v406 = vld [vmem:[#allocation2 + $0xb30] sm:$0xff]
    %v407 = vld [vmem:[#allocation2 + $0xb38] sm:$0xff]
    %v408 = vld [vmem:[#allocation2 + $0xb40] sm:$0xff]
    %v409 = vld [vmem:[#allocation2 + $0xb48] sm:$0xff]
    %v410 = vld [vmem:[#allocation2 + $0xb50] sm:$0xff]
    %v411 = vld [vmem:[#allocation2 + $0xb58] sm:$0xff]
    %v412 = vld [vmem:[#allocation2 + $0xb60] sm:$0xff]
    %v413 = vld [vmem:[#allocation2 + $0xb68] sm:$0xff]
    %v414 = vld [vmem:[#allocation2 + $0xb70] sm:$0xff]
    %v415 = vld [vmem:[#allocation2 + $0xb78] sm:$0xff]
    %v416 = vld [vmem:[#allocation2 + $0xb80] sm:$0xff]
    %v417 = vld [vmem:[#allocation2 + $0xb88] sm:$0xff]
    %v418 = vld [vmem:[#allocation2 + $0xb90] sm:$0xff]
    %v419 = vld [vmem:[#allocation2 + $0xb98] sm:$0xff]
    %v420 = vld [vmem:[#allocation2 + $0xba0] sm:$0xff]
    %v421 = vld [vmem:[#allocation2 + $0xba8] sm:$0xff]
    %v422 = vld [vmem:[#allocation2 + $0xbb0] sm:$0xff]
    %v423 = vld [vmem:[#allocation2 + $0xbb8] sm:$0xff]
    %v424 = vld [vmem:[#allocation2 + $0xbc0] sm:$0xff]
    %v425 = vld [vmem:[#allocation2 + $0xbc8] sm:$0xff]
    %v426 = vld [vmem:[#allocation2 + $0xbd0] sm:$0xff]
    %v427 = vld [vmem:[#allocation2 + $0xbd8] sm:$0xff]
    %v428 = vld [vmem:[#allocation2 + $0xbe0] sm:$0xff]
    %v429 = vld [vmem:[#allocation2 + $0xbe8] sm:$0xff]
    %v430 = vld [vmem:[#allocation2 + $0xbf0] sm:$0xff]
    %v431 = vld [vmem:[#allocation2 + $0xbf8] sm:$0xff]
    %v432 = vld [vmem:[#allocation2 + $0xc00] sm:$0xff]
    %v433 = vld [vmem:[#allocation2 + $0xc08] sm:$0xff]
    %v434 = vld [vmem:[#allocation2 + $0xc10] sm:$0xff]
    %v435 = vld [vmem:[#allocation2 + $0xc18] sm:$0xff]
    %v436 = vld [vmem:[#allocation2 + $0xc20] sm:$0xff]
    %v437 = vld [vmem:[#allocation2 + $0xc28] sm:$0xff]
    %v438 = vld [vmem:[#allocation2 + $0xc30] sm:$0xff]
    %v439 = vld [vmem:[#allocation2 + $0xc38] sm:$0xff]
    %v440 = vld [vmem:[#allocation2 + $0xc40] sm:$0xff]
    %v441 = vld [vmem:[#allocation2 + $0xc48] sm:$0xff]
    %v442 = vld [vmem:[#allocation2 + $0xc50] sm:$0xff]
    %v443 = vld [vmem:[#allocation2 + $0xc58] sm:$0xff]
    %v444 = vld [vmem:[#allocation2 + $0xc60] sm:$0xff]
    %v445 = vld [vmem:[#allocation2 + $0xc68] sm:$0xff]
    %v446 = vld [vmem:[#allocation2 + $0xc70] sm:$0xff]
    %v447 = vld [vmem:[#allocation2 + $0xc78] sm:$0xff]
    %v448 = vld [vmem:[#allocation2 + $0xc80] sm:$0xff]
    %v449 = vld [vmem:[#allocation2 + $0xc88] sm:$0xff]
    %v450 = vld [vmem:[#allocation2 + $0xc90] sm:$0xff]
    %v451 = vld [vmem:[#allocation2 + $0xc98] sm:$0xff]
    %v452 = vld [vmem:[#allocation2 + $0xca0] sm:$0xff]
    %v453 = vld [vmem:[#allocation2 + $0xca8] sm:$0xff]
    %v454 = vld [vmem:[#allocation2 + $0xcb0] sm:$0xff]
    %v455 = vld [vmem:[#allocation2 + $0xcb8] sm:$0xff]
    %v456 = vld [vmem:[#allocation2 + $0xcc0] sm:$0xff]
    %v457 = vld [vmem:[#allocation2 + $0xcc8] sm:$0xff]
    %v458 = vld [vmem:[#allocation2 + $0xcd0] sm:$0xff]
    %v459 = vld [vmem:[#allocation2 + $0xcd8] sm:$0xff]
    %v460 = vld [vmem:[#allocation2 + $0xce0] sm:$0xff]
    %v461 = vld [vmem:[#allocation2 + $0xce8] sm:$0xff]
    %v462 = vld [vmem:[#allocation2 + $0xcf0] sm:$0xff]
    %v463 = vld [vmem:[#allocation2 + $0xcf8] sm:$0xff]
    %v464 = vld [vmem:[#allocation2 + $0xd00] sm:$0xff]
    %v465 = vld [vmem:[#allocation2 + $0xd08] sm:$0xff]
    %v466 = vld [vmem:[#allocation2 + $0xd10] sm:$0xff]
    %v467 = vld [vmem:[#allocation2 + $0xd18] sm:$0xff]
    %v468 = vld [vmem:[#allocation2 + $0xd20] sm:$0xff]
    %v469 = vld [vmem:[#allocation2 + $0xd28] sm:$0xff]
    %v470 = vld [vmem:[#allocation2 + $0xd30] sm:$0xff]
    %v471 = vld [vmem:[#allocation2 + $0xd38] sm:$0xff]
    %v472 = vld [vmem:[#allocation2 + $0xd40] sm:$0xff]
    %v473 = vld [vmem:[#allocation2 + $0xd48] sm:$0xff]
    %v474 = vld [vmem:[#allocation2 + $0xd50] sm:$0xff]
    %v475 = vld [vmem:[#allocation2 + $0xd58] sm:$0xff]
    %v476 = vld [vmem:[#allocation2 + $0xd60] sm:$0xff]
    %v477 = vld [vmem:[#allocation2 + $0xd68] sm:$0xff]
    %v478 = vld [vmem:[#allocation2 + $0xd70] sm:$0xff]
    %v479 = vld [vmem:[#allocation2 + $0xd78] sm:$0xff]
    %v480 = vld [vmem:[#allocation2 + $0xd80] sm:$0xff]
    %v481 = vld [vmem:[#allocation2 + $0xd88] sm:$0xff]
    %v482 = vld [vmem:[#allocation2 + $0xd90] sm:$0xff]
    %v483 = vld [vmem:[#allocation2 + $0xd98] sm:$0xff]
    %v484 = vld [vmem:[#allocation2 + $0xda0] sm:$0xff]
    %v485 = vld [vmem:[#allocation2 + $0xda8] sm:$0xff]
    %v486 = vld [vmem:[#allocation2 + $0xdb0] sm:$0xff]
    %v487 = vld [vmem:[#allocation2 + $0xdb8] sm:$0xff]
    %v488 = vld [vmem:[#allocation2 + $0xdc0] sm:$0xff]
    %v489 = vld [vmem:[#allocation2 + $0xdc8] sm:$0xff]
    %v490 = vld [vmem:[#allocation2 + $0xdd0] sm:$0xff]
    %v491 = vld [vmem:[#allocation2 + $0xdd8] sm:$0xff]
    %v492 = vld [vmem:[#allocation2 + $0xde0] sm:$0xff]
    %v493 = vld [vmem:[#allocation2 + $0xde8] sm:$0xff]
    %v494 = vld [vmem:[#allocation2 + $0xdf0] sm:$0xff]
    %v495 = vld [vmem:[#allocation2 + $0xdf8] sm:$0xff]
    %v496 = vld [vmem:[#allocation2 + $0xe00] sm:$0xff]
    %v497 = vld [vmem:[#allocation2 + $0xe08] sm:$0xff]
    %v498 = vld [vmem:[#allocation2 + $0xe10] sm:$0xff]
    %v499 = vld [vmem:[#allocation2 + $0xe18] sm:$0xff]
    %v500 = vld [vmem:[#allocation2 + $0xe20] sm:$0xff]
    %v501 = vld [vmem:[#allocation2 + $0xe28] sm:$0xff]
    %v502 = vld [vmem:[#allocation2 + $0xe30] sm:$0xff]
    %v503 = vld [vmem:[#allocation2 + $0xe38] sm:$0xff]
    %v504 = vld [vmem:[#allocation2 + $0xe40] sm:$0xff]
    %v505 = vld [vmem:[#allocation2 + $0xe48] sm:$0xff]
    %v506 = vld [vmem:[#allocation2 + $0xe50] sm:$0xff]
    %v507 = vld [vmem:[#allocation2 + $0xe58] sm:$0xff]
    %v508 = vld [vmem:[#allocation2 + $0xe60] sm:$0xff]
    %v509 = vld [vmem:[#allocation2 + $0xe68] sm:$0xff]
    %v510 = vld [vmem:[#allocation2 + $0xe70] sm:$0xff]
    %v511 = vld [vmem:[#allocation2 + $0xe78] sm:$0xff]
    %v512 = vld [vmem:[#allocation2 + $0xe80] sm:$0xff]
    %v513 = vld [vmem:[#allocation2 + $0xe88] sm:$0xff]
    %v514 = vld [vmem:[#allocation2 + $0xe90] sm:$0xff]
    %v515 = vld [vmem:[#allocation2 + $0xe98] sm:$0xff]
    %v516 = vld [vmem:[#allocation2 + $0xea0] sm:$0xff]
    %v517 = vld [vmem:[#allocation2 + $0xea8] sm:$0xff]
    %v518 = vld [vmem:[#allocation2 + $0xeb0] sm:$0xff]
    %v519 = vld [vmem:[#allocation2 + $0xeb8] sm:$0xff]
    %v520 = vld [vmem:[#allocation2 + $0xec0] sm:$0xff]
    %v521 = vld [vmem:[#allocation2 + $0xec8] sm:$0xff]
    %v522 = vld [vmem:[#allocation2 + $0xed0] sm:$0xff]
    %v523 = vld [vmem:[#allocation2 + $0xed8] sm:$0xff]
    %v524 = vld [vmem:[#allocation2 + $0xee0] sm:$0xff]
    %v525 = vld [vmem:[#allocation2 + $0xee8] sm:$0xff]
    %v526 = vld [vmem:[#allocation2 + $0xef0] sm:$0xff]
    %v527 = vld [vmem:[#allocation2 + $0xef8] sm:$0xff]
    %v528 = vld [vmem:[#allocation2 + $0xf00] sm:$0xff]
    %v529 = vld [vmem:[#allocation2 + $0xf08] sm:$0xff]
    %v530 = vld [vmem:[#allocation2 + $0xf10] sm:$0xff]
    %v531 = vld [vmem:[#allocation2 + $0xf18] sm:$0xff]
    %v532 = vld [vmem:[#allocation2 + $0xf20] sm:$0xff]
    %v533 = vld [vmem:[#allocation2 + $0xf28] sm:$0xff]
    %v534 = vld [vmem:[#allocation2 + $0xf30] sm:$0xff]
    %v535 = vld [vmem:[#allocation2 + $0xf38] sm:$0xff]
    %v536 = vld [vmem:[#allocation2 + $0xf40] sm:$0xff]
    %v537 = vld [vmem:[#allocation2 + $0xf48] sm:$0xff]
    %v538 = vld [vmem:[#allocation2 + $0xf50] sm:$0xff]
    %v539 = vld [vmem:[#allocation2 + $0xf58] sm:$0xff]
    %v540 = vld [vmem:[#allocation2 + $0xf60] sm:$0xff]
    %v541 = vld [vmem:[#allocation2 + $0xf68] sm:$0xff]
    %v542 = vld [vmem:[#allocation2 + $0xf70] sm:$0xff]
    %v543 = vld [vmem:[#allocation2 + $0xf78] sm:$0xff]
    %v544 = vld [vmem:[#allocation2 + $0xf80] sm:$0xff]
    %v545 = vld [vmem:[#allocation2 + $0xf88] sm:$0xff]
    %v546 = vld [vmem:[#allocation2 + $0xf90] sm:$0xff]
    %v547 = vld [vmem:[#allocation2 + $0xf98] sm:$0xff]
    %v548 = vld [vmem:[#allocation2 + $0xfa0] sm:$0xff]
    %v549 = vld [vmem:[#allocation2 + $0xfa8] sm:$0xff]
    %v550 = vld [vmem:[#allocation2 + $0xfb0] sm:$0xff]
    %v551 = vld [vmem:[#allocation2 + $0xfb8] sm:$0xff]
    %v552 = vld [vmem:[#allocation2 + $0xfc0] sm:$0xff]
    %v553 = vld [vmem:[#allocation2 + $0xfc8] sm:$0xff]
    %v554 = vld [vmem:[#allocation2 + $0xfd0] sm:$0xff]
    %v555 = vld [vmem:[#allocation2 + $0xfd8] sm:$0xff]
    %v556 = vld [vmem:[#allocation2 + $0xfe0] sm:$0xff]
    %v557 = vld [vmem:[#allocation2 + $0xfe8] sm:$0xff]
    %v558 = vld [vmem:[#allocation2 + $0xff0] sm:$0xff]
    %v559 = vld [vmem:[#allocation2 + $0xff8] sm:$0xff]
    %v560 = vld [vmem:[#allocation2 + $0x1000] sm:$0xff]
    %v561 = vld [vmem:[#allocation2 + $0x1008] sm:$0xff]
    %v562 = vld [vmem:[#allocation2 + $0x1010] sm:$0xff]
    %v563 = vld [vmem:[#allocation2 + $0x1018] sm:$0xff]
    %v564 = vld [vmem:[#allocation2 + $0x1020] sm:$0xff]
    %v565 = vld [vmem:[#allocation2 + $0x1028] sm:$0xff]
    %v566 = vld [vmem:[#allocation2 + $0x1030] sm:$0xff]
    %v567 = vld [vmem:[#allocation2 + $0x1038] sm:$0xff]
    %v568 = vld [vmem:[#allocation2 + $0x1040] sm:$0xff]
    %v569 = vld [vmem:[#allocation2 + $0x1048] sm:$0xff]
    %v570 = vld [vmem:[#allocation2 + $0x1050] sm:$0xff]
    %v571 = vld [vmem:[#allocation2 + $0x1058] sm:$0xff]
    %v572 = vld [vmem:[#allocation2 + $0x1060] sm:$0xff]
    %v573 = vld [vmem:[#allocation2 + $0x1068] sm:$0xff]
    %v574 = vld [vmem:[#allocation2 + $0x1070] sm:$0xff]
    %v575 = vld [vmem:[#allocation2 + $0x1078] sm:$0xff]
    %v576 = vld [vmem:[#allocation2 + $0x1080] sm:$0xff]
    %v577 = vld [vmem:[#allocation2 + $0x1088] sm:$0xff]
    %v578 = vld [vmem:[#allocation2 + $0x1090] sm:$0xff]
    %v579 = vld [vmem:[#allocation2 + $0x1098] sm:$0xff]
    %v580 = vld [vmem:[#allocation2 + $0x10a0] sm:$0xff]
    %v581 = vld [vmem:[#allocation2 + $0x10a8] sm:$0xff]
    %v582 = vld [vmem:[#allocation2 + $0x10b0] sm:$0xff]
    %v583 = vld [vmem:[#allocation2 + $0x10b8] sm:$0xff]
    %v584 = vld [vmem:[#allocation2 + $0x10c0] sm:$0xff]
    %v585 = vld [vmem:[#allocation2 + $0x10c8] sm:$0xff]
    %v586 = vld [vmem:[#allocation2 + $0x10d0] sm:$0xff]
    %v587 = vld [vmem:[#allocation2 + $0x10d8] sm:$0xff]
    %v588 = vld [vmem:[#allocation2 + $0x10e0] sm:$0xff]
    %v589 = vld [vmem:[#allocation2 + $0x10e8] sm:$0xff]
    %v590 = vld [vmem:[#allocation2 + $0x10f0] sm:$0xff]
    %v591 = vld [vmem:[#allocation2 + $0x10f8] sm:$0xff]
    %v592 = vld [vmem:[#allocation2 + $0x1100] sm:$0xff]
    %v593 = vld [vmem:[#allocation2 + $0x1108] sm:$0xff]
    %v594 = vld [vmem:[#allocation2 + $0x1110] sm:$0xff]
    %v595 = vld [vmem:[#allocation2 + $0x1118] sm:$0xff]
    %v596 = vld [vmem:[#allocation2 + $0x1120] sm:$0xff]
    %v597 = vld [vmem:[#allocation2 + $0x1128] sm:$0xff]
    %v598 = vld [vmem:[#allocation2 + $0x1130] sm:$0xff]
    %v599 = vld [vmem:[#allocation2 + $0x1138] sm:$0xff]
    %v600 = vld [vmem:[#allocation2 + $0x1140] sm:$0xff]
    %v601 = vld [vmem:[#allocation2 + $0x1148] sm:$0xff]
    %v602 = vld [vmem:[#allocation2 + $0x1150] sm:$0xff]
    %v603 = vld [vmem:[#allocation2 + $0x1158] sm:$0xff]
    %v604 = vld [vmem:[#allocation2 + $0x1160] sm:$0xff]
    %v605 = vld [vmem:[#allocation2 + $0x1168] sm:$0xff]
    %v606 = vld [vmem:[#allocation2 + $0x1170] sm:$0xff]
    %v607 = vld [vmem:[#allocation2 + $0x1178] sm:$0xff]
    %v608 = vld [vmem:[#allocation2 + $0x1180] sm:$0xff]
    %v609 = vld [vmem:[#allocation2 + $0x1188] sm:$0xff]
    %v610 = vld [vmem:[#allocation2 + $0x1190] sm:$0xff]
    %v611 = vld [vmem:[#allocation2 + $0x1198] sm:$0xff]
    %v612 = vld [vmem:[#allocation2 + $0x11a0] sm:$0xff]
    %v613 = vld [vmem:[#allocation2 + $0x11a8] sm:$0xff]
    %v614 = vld [vmem:[#allocation2 + $0x11b0] sm:$0xff]
    %v615 = vld [vmem:[#allocation2 + $0x11b8] sm:$0xff]
    %v616 = vld [vmem:[#allocation2 + $0x11c0] sm:$0xff]
    %v617 = vld [vmem:[#allocation2 + $0x11c8] sm:$0xff]
    %v618 = vld [vmem:[#allocation2 + $0x11d0] sm:$0xff]
    %v619 = vld [vmem:[#allocation2 + $0x11d8] sm:$0xff]
    %v620 = vld [vmem:[#allocation2 + $0x11e0] sm:$0xff]
    %v621 = vld [vmem:[#allocation2 + $0x11e8] sm:$0xff]
    %v622 = vld [vmem:[#allocation2 + $0x11f0] sm:$0xff]
    %v623 = vld [vmem:[#allocation2 + $0x11f8] sm:$0xff]
    %v624 = vld [vmem:[#allocation4] sm:$0xff]
    %v625 = vld [vmem:[#allocation4 + $0x8] sm:$0xff]
    %v626 = vld [vmem:[#allocation4 + $0x10] sm:$0xff]
    %v627 = vld [vmem:[#allocation4 + $0x18] sm:$0xff]
    %v632 = vlaneseq
    %v633 = vshrl.u32 %v632, 7
    %v634 = vsub.s32 0, %v633
    %v635 = vrot.slane %v624, %v634
    %v636 = vlaneseq
    %v637 = vshrl.u32 %v636, 7
    %v638 = vsub.s32 1, %v637
    %v639 = vrot.slane %v624, %v638
    %v640 = vlaneseq
    %v641 = vshrl.u32 %v640, 7
    %v642 = vsub.s32 2, %v641
    %v643 = vrot.slane %v624, %v642
    %v644 = vlaneseq
    %v645 = vshrl.u32 %v644, 7
    %v646 = vsub.s32 3, %v645
    %v647 = vrot.slane %v624, %v646
    %v648 = vlaneseq
    %v649 = vshrl.u32 %v648, 7
    %v650 = vsub.s32 4, %v649
    %v651 = vrot.slane %v624, %v650
    %v652 = vlaneseq
    %v653 = vshrl.u32 %v652, 7
    %v654 = vsub.s32 5, %v653
    %v655 = vrot.slane %v624, %v654
    %v656 = vlaneseq
    %v657 = vshrl.u32 %v656, 7
    %v658 = vsub.s32 6, %v657
    %v659 = vrot.slane %v624, %v658
    %v660 = vlaneseq
    %v661 = vshrl.u32 %v660, 7
    %v662 = vsub.s32 7, %v661
    %v663 = vrot.slane %v624, %v662
    %v664 = vlaneseq
    %v665 = vshrl.u32 %v664, 7
    %v666 = vsub.s32 0, %v665
    %v667 = vrot.slane %v625, %v666
    %v668 = vlaneseq
    %v669 = vshrl.u32 %v668, 7
    %v670 = vsub.s32 1, %v669
    %v671 = vrot.slane %v625, %v670
    %v672 = vlaneseq
    %v673 = vshrl.u32 %v672, 7
    %v674 = vsub.s32 2, %v673
    %v675 = vrot.slane %v625, %v674
    %v676 = vlaneseq
    %v677 = vshrl.u32 %v676, 7
    %v678 = vsub.s32 3, %v677
    %v679 = vrot.slane %v625, %v678
    %v680 = vlaneseq
    %v681 = vshrl.u32 %v680, 7
    %v682 = vsub.s32 4, %v681
    %v683 = vrot.slane %v625, %v682
    %v684 = vlaneseq
    %v685 = vshrl.u32 %v684, 7
    %v686 = vsub.s32 5, %v685
    %v687 = vrot.slane %v625, %v686
    %v688 = vlaneseq
    %v689 = vshrl.u32 %v688, 7
    %v690 = vsub.s32 6, %v689
    %v691 = vrot.slane %v625, %v690
    %v692 = vlaneseq
    %v693 = vshrl.u32 %v692, 7
    %v694 = vsub.s32 7, %v693
    %v695 = vrot.slane %v625, %v694
    %v696 = vlaneseq
    %v697 = vshrl.u32 %v696, 7
    %v698 = vsub.s32 0, %v697
    %v699 = vrot.slane %v626, %v698
    %v700 = vlaneseq
    %v701 = vshrl.u32 %v700, 7
    %v702 = vsub.s32 1, %v701
    %v703 = vrot.slane %v626, %v702
    %v704 = vlaneseq
    %v705 = vshrl.u32 %v704, 7
    %v706 = vsub.s32 2, %v705
    %v707 = vrot.slane %v626, %v706
    %v708 = vlaneseq
    %v709 = vshrl.u32 %v708, 7
    %v710 = vsub.s32 3, %v709
    %v711 = vrot.slane %v626, %v710
    %v712 = vlaneseq
    %v713 = vshrl.u32 %v712, 7
    %v714 = vsub.s32 4, %v713
    %v715 = vrot.slane %v626, %v714
    %v716 = vlaneseq
    %v717 = vshrl.u32 %v716, 7
    %v718 = vsub.s32 5, %v717
    %v719 = vrot.slane %v626, %v718
    %v720 = vlaneseq
    %v721 = vshrl.u32 %v720, 7
    %v722 = vsub.s32 6, %v721
    %v723 = vrot.slane %v626, %v722
    %v724 = vlaneseq
    %v725 = vshrl.u32 %v724, 7
    %v726 = vsub.s32 7, %v725
    %v727 = vrot.slane %v626, %v726
    %v728 = vlaneseq
    %v729 = vshrl.u32 %v728, 7
    %v730 = vsub.s32 0, %v729
    %v731 = vrot.slane %v627, %v730
    %v732 = vlaneseq
    %v733 = vshrl.u32 %v732, 7
    %v734 = vsub.s32 1, %v733
    %v735 = vrot.slane %v627, %v734
    %v736 = vlaneseq
    %v737 = vshrl.u32 %v736, 7
    %v738 = vsub.s32 2, %v737
    %v739 = vrot.slane %v627, %v738
    %v740 = vlaneseq
    %v741 = vshrl.u32 %v740, 7
    %v742 = vsub.s32 3, %v741
    %v743 = vrot.slane %v627, %v742
    %v744 = vlaneseq
    %v745 = vshrl.u32 %v744, 7
    %v746 = vsub.s32 4, %v745
    %v747 = vrot.slane %v627, %v746
    %v748 = vlaneseq
    %v749 = vshrl.u32 %v748, 7
    %v750 = vsub.s32 5, %v749
    %v751 = vrot.slane %v627, %v750
    %v752 = vlaneseq
    %v753 = vshrl.u32 %v752, 7
    %v754 = vsub.s32 6, %v753
    %v755 = vrot.slane %v627, %v754
    %v756 = vlaneseq
    %v757 = vshrl.u32 %v756, 7
    %v758 = vsub.s32 7, %v757
    %v759 = vrot.slane %v627, %v758
    %vm792 = vcmask 130048
    %v794 = vsel %vm792, %v41, 0
    %v797 = vsel %vm792, %v43, 0
    %v800 = vsel %vm792, %v45, 0
    %v803 = vsel %vm792, %v47, 0
    %805 = vmatprep.subr.mxu0 %v529
    %806 = vmatpush1.msra.mxu0 %v528
    %807 = vmatprep.subr.mxu0 %v497
    %808 = vmatpush1.msra.mxu0 %v496
    %809 = vmatprep.subr.mxu0 %v465
    %810 = vmatpush1.msra.mxu0 %v464
    %811 = vmatprep.subr.mxu0 %v433
    %812 = vmatpush1.msra.mxu0 %v432
    %813 = vmatprep.subr.mxu0 %v401
    %814 = vmatpush1.msra.mxu0 %v400
    %815 = vmatprep.subr.mxu0 %v369
    %816 = vmatpush1.msra.mxu0 %v368
    %817 = vmatprep.subr.mxu0 %v337
    %818 = vmatpush1.msra.mxu0 %v336
    %819 = vmatprep.subr.mxu0 %v305
    %820 = vmatpush1.msra.mxu0 %v304
    %821 = vmatprep.subr.mxu0 %v273
    %822 = vmatpush1.msra.mxu0 %v272
    %823 = vmatprep.subr.mxu0 %v241
    %824 = vmatpush1.msra.mxu0 %v240
    %825 = vmatprep.subr.mxu0 %v209
    %826 = vmatpush1.msra.mxu0 %v208
    %827 = vmatprep.subr.mxu0 %v177
    %828 = vmatpush1.msra.mxu0 %v176
    %829 = vmatprep.subr.mxu0 %v145
    %830 = vmatpush1.msra.mxu0 %v144
    %831 = vmatprep.subr.mxu0 %v113
    %832 = vmatpush1.msra.mxu0 %v112
    %833 = vmatprep.subr.mxu0 %v81
    %834 = vmatpush1.msra.mxu0 %v80
    %835 = vmatprep.subr.mxu0 %v49
    %836 = vmatpush1.msra.mxu0 %v48
    %837 = vmatprep.subr.mxu0 0.0
    %838 = vmatpush2.msra.mxu0 0.0
    %839 = vmatprep.subr.mxu0 0.0
    %840 = vmatpush2.msra.mxu0 0.0
    %841 = vmatprep.subr.mxu0 0.0
    %842 = vmatpush2.msra.mxu0 0.0
    %843 = vmatprep.subr.mxu0 0.0
    %844 = vmatpush2.msra.mxu0 0.0
    %845 = vmatprep.subr.mxu0 0.0
    %846 = vmatpush2.msra.mxu0 0.0
    %847 = vmatprep.subr.mxu0 0.0
    %848 = vmatpush2.msra.mxu0 0.0
    %849 = vmatprep.subr.mxu0 0.0
    %850 = vmatpush2.msra.mxu0 0.0
    %851 = vmatprep.subr.mxu0 0.0
    %852 = vmatpush2.msra.mxu0 0.0
    %853 = vmatprep.subr.mxu0 0.0
    %854 = vmatpush2.msra.mxu0 0.0
    %855 = vmatprep.subr.mxu0 0.0
    %856 = vmatpush2.msra.mxu0 0.0
    %857 = vmatprep.subr.mxu0 0.0
    %858 = vmatpush2.msra.mxu0 0.0
    %859 = vmatprep.subr.mxu0 0.0
    %860 = vmatpush2.msra.mxu0 0.0
    %861 = vmatprep.subr.mxu0 0.0
    %862 = vmatpush2.msra.mxu0 0.0
    %863 = vmatprep.subr.mxu0 0.0
    %864 = vmatpush2.msra.mxu0 0.0
    %865 = vmatprep.subr.mxu0 %v593
    %866 = vmatpush2.msra.mxu0 %v592
    %867 = vmatprep.subr.mxu0 %v561
    %868 = vmatpush2.msra.mxu0 %v560
    %869 = vmatprep.mubr.f32.mxu0 %v794
    %870 = vmatmul.mubr.f32.gmra.mxu0 %v40
    %v871 = vpop.f32.mrf.mxu0
    %v872 = vadd.f32 %v635, %v871
    %v873 = vpop.f32.mrf.mxu0
    %v874 = vadd.f32 %v639, %v873
    %875 = vmatprep.mubr.f32.mxu0 %v797
    %876 = vmatmul.mubr.f32.gmra.mxu0 %v42
    %v877 = vpop.f32.mrf.mxu0
    %v878 = vadd.f32 %v635, %v877
    %v879 = vpop.f32.mrf.mxu0
    %v880 = vadd.f32 %v639, %v879
    %881 = vmatprep.mubr.f32.mxu0 %v800
    %882 = vmatmul.mubr.f32.gmra.mxu0 %v44
    %v883 = vpop.f32.mrf.mxu0
    %v884 = vadd.f32 %v635, %v883
    %v885 = vpop.f32.mrf.mxu0
    %v886 = vadd.f32 %v639, %v885
    %887 = vmatprep.mubr.f32.mxu0 %v803
    %888 = vmatmul.mubr.f32.gmra.mxu0 %v46
    %v889 = vpop.f32.mrf.mxu0
    %v890 = vadd.f32 %v635, %v889
    %v891 = vpop.f32.mrf.mxu0
    %v892 = vadd.f32 %v639, %v891
    %893 = vdwg.mxu0
    %894 = vmatprep.subr.mxu0 %v531
    %895 = vmatpush1.msra.mxu0 %v530
    %896 = vmatprep.subr.mxu0 %v499
    %897 = vmatpush1.msra.mxu0 %v498
    %898 = vmatprep.subr.mxu0 %v467
    %899 = vmatpush1.msra.mxu0 %v466
    %900 = vmatprep.subr.mxu0 %v435
    %901 = vmatpush1.msra.mxu0 %v434
    %902 = vmatprep.subr.mxu0 %v403
    %903 = vmatpush1.msra.mxu0 %v402
    %904 = vmatprep.subr.mxu0 %v371
    %905 = vmatpush1.msra.mxu0 %v370
    %906 = vmatprep.subr.mxu0 %v339
    %907 = vmatpush1.msra.mxu0 %v338
    %908 = vmatprep.subr.mxu0 %v307
    %909 = vmatpush1.msra.mxu0 %v306
    %910 = vmatprep.subr.mxu0 %v275
    %911 = vmatpush1.msra.mxu0 %v274
    %912 = vmatprep.subr.mxu0 %v243
    %913 = vmatpush1.msra.mxu0 %v242
    %914 = vmatprep.subr.mxu0 %v211
    %915 = vmatpush1.msra.mxu0 %v210
    %916 = vmatprep.subr.mxu0 %v179
    %917 = vmatpush1.msra.mxu0 %v178
    %918 = vmatprep.subr.mxu0 %v147
    %919 = vmatpush1.msra.mxu0 %v146
    %920 = vmatprep.subr.mxu0 %v115
    %921 = vmatpush1.msra.mxu0 %v114
    %922 = vmatprep.subr.mxu0 %v83
    %923 = vmatpush1.msra.mxu0 %v82
    %924 = vmatprep.subr.mxu0 %v51
    %925 = vmatpush1.msra.mxu0 %v50
    %926 = vmatprep.subr.mxu0 0.0
    %927 = vmatpush2.msra.mxu0 0.0
    %928 = vmatprep.subr.mxu0 0.0
    %929 = vmatpush2.msra.mxu0 0.0
    %930 = vmatprep.subr.mxu0 0.0
    %931 = vmatpush2.msra.mxu0 0.0
    %932 = vmatprep.subr.mxu0 0.0
    %933 = vmatpush2.msra.mxu0 0.0
    %934 = vmatprep.subr.mxu0 0.0
    %935 = vmatpush2.msra.mxu0 0.0
    %936 = vmatprep.subr.mxu0 0.0
    %937 = vmatpush2.msra.mxu0 0.0
    %938 = vmatprep.subr.mxu0 0.0
    %939 = vmatpush2.msra.mxu0 0.0
    %940 = vmatprep.subr.mxu0 0.0
    %941 = vmatpush2.msra.mxu0 0.0
    %942 = vmatprep.subr.mxu0 0.0
    %943 = vmatpush2.msra.mxu0 0.0
    %944 = vmatprep.subr.mxu0 0.0
    %945 = vmatpush2.msra.mxu0 0.0
    %946 = vmatprep.subr.mxu0 0.0
    %947 = vmatpush2.msra.mxu0 0.0
    %948 = vmatprep.subr.mxu0 0.0
    %949 = vmatpush2.msra.mxu0 0.0
    %950 = vmatprep.subr.mxu0 0.0
    %951 = vmatpush2.msra.mxu0 0.0
    %952 = vmatprep.subr.mxu0 0.0
    %953 = vmatpush2.msra.mxu0 0.0
    %954 = vmatprep.subr.mxu0 %v595
    %955 = vmatpush2.msra.mxu0 %v594
    %956 = vmatprep.subr.mxu0 %v563
    %957 = vmatpush2.msra.mxu0 %v562
    %958 = vmatprep.mubr.f32.mxu0 %v794
    %959 = vmatmul.mubr.f32.gmra.mxu0 %v40
    %v960 = vpop.f32.mrf.mxu0
    %v961 = vadd.f32 %v643, %v960
    %v962 = vpop.f32.mrf.mxu0
    %v963 = vadd.f32 %v647, %v962
    %964 = vmatprep.mubr.f32.mxu0 %v797
    %965 = vmatmul.mubr.f32.gmra.mxu0 %v42
    %v966 = vpop.f32.mrf.mxu0
    %v967 = vadd.f32 %v643, %v966
    %v968 = vpop.f32.mrf.mxu0
    %v969 = vadd.f32 %v647, %v968
    %970 = vmatprep.mubr.f32.mxu0 %v800
    %971 = vmatmul.mubr.f32.gmra.mxu0 %v44
    %v972 = vpop.f32.mrf.mxu0
    %v973 = vadd.f32 %v643, %v972
    %v974 = vpop.f32.mrf.mxu0
    %v975 = vadd.f32 %v647, %v974
    %976 = vmatprep.mubr.f32.mxu0 %v803
    %977 = vmatmul.mubr.f32.gmra.mxu0 %v46
    %v978 = vpop.f32.mrf.mxu0
    %v979 = vadd.f32 %v643, %v978
    %v980 = vpop.f32.mrf.mxu0
    %v981 = vadd.f32 %v647, %v980
    %982 = vdwg.mxu0
    %983 = vmatprep.subr.mxu0 %v533
    %984 = vmatpush1.msra.mxu0 %v532
    %985 = vmatprep.subr.mxu0 %v501
    %986 = vmatpush1.msra.mxu0 %v500
    %987 = vmatprep.subr.mxu0 %v469
    %988 = vmatpush1.msra.mxu0 %v468
    %989 = vmatprep.subr.mxu0 %v437
    %990 = vmatpush1.msra.mxu0 %v436
    %991 = vmatprep.subr.mxu0 %v405
    %992 = vmatpush1.msra.mxu0 %v404
    %993 = vmatprep.subr.mxu0 %v373
    %994 = vmatpush1.msra.mxu0 %v372
    %995 = vmatprep.subr.mxu0 %v341
    %996 = vmatpush1.msra.mxu0 %v340
    %997 = vmatprep.subr.mxu0 %v309
    %998 = vmatpush1.msra.mxu0 %v308
    %999 = vmatprep.subr.mxu0 %v277
    %1000 = vmatpush1.msra.mxu0 %v276
    %1001 = vmatprep.subr.mxu0 %v245
    %1002 = vmatpush1.msra.mxu0 %v244
    %1003 = vmatprep.subr.mxu0 %v213
    %1004 = vmatpush1.msra.mxu0 %v212
    %1005 = vmatprep.subr.mxu0 %v181
    %1006 = vmatpush1.msra.mxu0 %v180
    %1007 = vmatprep.subr.mxu0 %v149
    %1008 = vmatpush1.msra.mxu0 %v148
    %1009 = vmatprep.subr.mxu0 %v117
    %1010 = vmatpush1.msra.mxu0 %v116
    %1011 = vmatprep.subr.mxu0 %v85
    %1012 = vmatpush1.msra.mxu0 %v84
    %1013 = vmatprep.subr.mxu0 %v53
    %1014 = vmatpush1.msra.mxu0 %v52
    %1015 = vmatprep.subr.mxu0 0.0
    %1016 = vmatpush2.msra.mxu0 0.0
    %1017 = vmatprep.subr.mxu0 0.0
    %1018 = vmatpush2.msra.mxu0 0.0
    %1019 = vmatprep.subr.mxu0 0.0
    %1020 = vmatpush2.msra.mxu0 0.0
    %1021 = vmatprep.subr.mxu0 0.0
    %1022 = vmatpush2.msra.mxu0 0.0
    %1023 = vmatprep.subr.mxu0 0.0
    %1024 = vmatpush2.msra.mxu0 0.0
    %1025 = vmatprep.subr.mxu0 0.0
    %1026 = vmatpush2.msra.mxu0 0.0
    %1027 = vmatprep.subr.mxu0 0.0
    %1028 = vmatpush2.msra.mxu0 0.0
    %1029 = vmatprep.subr.mxu0 0.0
    %1030 = vmatpush2.msra.mxu0 0.0
    %1031 = vmatprep.subr.mxu0 0.0
    %1032 = vmatpush2.msra.mxu0 0.0
    %1033 = vmatprep.subr.mxu0 0.0
    %1034 = vmatpush2.msra.mxu0 0.0
    %1035 = vmatprep.subr.mxu0 0.0
    %1036 = vmatpush2.msra.mxu0 0.0
    %1037 = vmatprep.subr.mxu0 0.0
    %1038 = vmatpush2.msra.mxu0 0.0
    %1039 = vmatprep.subr.mxu0 0.0
    %1040 = vmatpush2.msra.mxu0 0.0
    %1041 = vmatprep.subr.mxu0 0.0
    %1042 = vmatpush2.msra.mxu0 0.0
    %1043 = vmatprep.subr.mxu0 %v597
    %1044 = vmatpush2.msra.mxu0 %v596
    %1045 = vmatprep.subr.mxu0 %v565
    %1046 = vmatpush2.msra.mxu0 %v564
    %1047 = vmatprep.mubr.f32.mxu0 %v794
    %1048 = vmatmul.mubr.f32.gmra.mxu0 %v40
    %v1049 = vpop.f32.mrf.mxu0
    %v1050 = vadd.f32 %v651, %v1049
    %v1051 = vpop.f32.mrf.mxu0
    %v1052 = vadd.f32 %v655, %v1051
    %1053 = vmatprep.mubr.f32.mxu0 %v797
    %1054 = vmatmul.mubr.f32.gmra.mxu0 %v42
    %v1055 = vpop.f32.mrf.mxu0
    %v1056 = vadd.f32 %v651, %v1055
    %v1057 = vpop.f32.mrf.mxu0
    %v1058 = vadd.f32 %v655, %v1057
    %1059 = vmatprep.mubr.f32.mxu0 %v800
    %1060 = vmatmul.mubr.f32.gmra.mxu0 %v44
    %v1061 = vpop.f32.mrf.mxu0
    %v1062 = vadd.f32 %v651, %v1061
    %v1063 = vpop.f32.mrf.mxu0
    %v1064 = vadd.f32 %v655, %v1063
    %1065 = vmatprep.mubr.f32.mxu0 %v803
    %1066 = vmatmul.mubr.f32.gmra.mxu0 %v46
    %v1067 = vpop.f32.mrf.mxu0
    %v1068 = vadd.f32 %v651, %v1067
    %v1069 = vpop.f32.mrf.mxu0
    %v1070 = vadd.f32 %v655, %v1069
    %1071 = vdwg.mxu0
    %1072 = vmatprep.subr.mxu0 %v535
    %1073 = vmatpush1.msra.mxu0 %v534
    %1074 = vmatprep.subr.mxu0 %v503
    %1075 = vmatpush1.msra.mxu0 %v502
    %1076 = vmatprep.subr.mxu0 %v471
    %1077 = vmatpush1.msra.mxu0 %v470
    %1078 = vmatprep.subr.mxu0 %v439
    %1079 = vmatpush1.msra.mxu0 %v438
    %1080 = vmatprep.subr.mxu0 %v407
    %1081 = vmatpush1.msra.mxu0 %v406
    %1082 = vmatprep.subr.mxu0 %v375
    %1083 = vmatpush1.msra.mxu0 %v374
    %1084 = vmatprep.subr.mxu0 %v343
    %1085 = vmatpush1.msra.mxu0 %v342
    %1086 = vmatprep.subr.mxu0 %v311
    %1087 = vmatpush1.msra.mxu0 %v310
    %1088 = vmatprep.subr.mxu0 %v279
    %1089 = vmatpush1.msra.mxu0 %v278
    %1090 = vmatprep.subr.mxu0 %v247
    %1091 = vmatpush1.msra.mxu0 %v246
    %1092 = vmatprep.subr.mxu0 %v215
    %1093 = vmatpush1.msra.mxu0 %v214
    %1094 = vmatprep.subr.mxu0 %v183
    %1095 = vmatpush1.msra.mxu0 %v182
    %1096 = vmatprep.subr.mxu0 %v151
    %1097 = vmatpush1.msra.mxu0 %v150
    %1098 = vmatprep.subr.mxu0 %v119
    %1099 = vmatpush1.msra.mxu0 %v118
    %1100 = vmatprep.subr.mxu0 %v87
    %1101 = vmatpush1.msra.mxu0 %v86
    %1102 = vmatprep.subr.mxu0 %v55
    %1103 = vmatpush1.msra.mxu0 %v54
    %1104 = vmatprep.subr.mxu0 0.0
    %1105 = vmatpush2.msra.mxu0 0.0
    %1106 = vmatprep.subr.mxu0 0.0
    %1107 = vmatpush2.msra.mxu0 0.0
    %1108 = vmatprep.subr.mxu0 0.0
    %1109 = vmatpush2.msra.mxu0 0.0
    %1110 = vmatprep.subr.mxu0 0.0
    %1111 = vmatpush2.msra.mxu0 0.0
    %1112 = vmatprep.subr.mxu0 0.0
    %1113 = vmatpush2.msra.mxu0 0.0
    %1114 = vmatprep.subr.mxu0 0.0
    %1115 = vmatpush2.msra.mxu0 0.0
    %1116 = vmatprep.subr.mxu0 0.0
    %1117 = vmatpush2.msra.mxu0 0.0
    %1118 = vmatprep.subr.mxu0 0.0
    %1119 = vmatpush2.msra.mxu0 0.0
    %1120 = vmatprep.subr.mxu0 0.0
    %1121 = vmatpush2.msra.mxu0 0.0
    %1122 = vmatprep.subr.mxu0 0.0
    %1123 = vmatpush2.msra.mxu0 0.0
    %1124 = vmatprep.subr.mxu0 0.0
    %1125 = vmatpush2.msra.mxu0 0.0
    %1126 = vmatprep.subr.mxu0 0.0
    %1127 = vmatpush2.msra.mxu0 0.0
    %1128 = vmatprep.subr.mxu0 0.0
    %1129 = vmatpush2.msra.mxu0 0.0
    %1130 = vmatprep.subr.mxu0 0.0
    %1131 = vmatpush2.msra.mxu0 0.0
    %1132 = vmatprep.subr.mxu0 %v599
    %1133 = vmatpush2.msra.mxu0 %v598
    %1134 = vmatprep.subr.mxu0 %v567
    %1135 = vmatpush2.msra.mxu0 %v566
    %1136 = vmatprep.mubr.f32.mxu0 %v794
    %1137 = vmatmul.mubr.f32.gmra.mxu0 %v40
    %v1138 = vpop.f32.mrf.mxu0
    %v1139 = vadd.f32 %v659, %v1138
    %v1140 = vpop.f32.mrf.mxu0
    %v1141 = vadd.f32 %v663, %v1140
    %1142 = vmatprep.mubr.f32.mxu0 %v797
    %1143 = vmatmul.mubr.f32.gmra.mxu0 %v42
    %v1144 = vpop.f32.mrf.mxu0
    %v1145 = vadd.f32 %v659, %v1144
    %v1146 = vpop.f32.mrf.mxu0
    %v1147 = vadd.f32 %v663, %v1146
    %1148 = vmatprep.mubr.f32.mxu0 %v800
    %1149 = vmatmul.mubr.f32.gmra.mxu0 %v44
    %v1150 = vpop.f32.mrf.mxu0
    %v1151 = vadd.f32 %v659, %v1150
    %v1152 = vpop.f32.mrf.mxu0
    %v1153 = vadd.f32 %v663, %v1152
    %1154 = vmatprep.mubr.f32.mxu0 %v803
    %1155 = vmatmul.mubr.f32.gmra.mxu0 %v46
    %v1156 = vpop.f32.mrf.mxu0
    %v1157 = vadd.f32 %v659, %v1156
    %v1158 = vpop.f32.mrf.mxu0
    %v1159 = vadd.f32 %v663, %v1158
    %1160 = vdwg.mxu0
    %1161 = vmatprep.subr.mxu0 %v537
    %1162 = vmatpush1.msra.mxu0 %v536
    %1163 = vmatprep.subr.mxu0 %v505
    %1164 = vmatpush1.msra.mxu0 %v504
    %1165 = vmatprep.subr.mxu0 %v473
    %1166 = vmatpush1.msra.mxu0 %v472
    %1167 = vmatprep.subr.mxu0 %v441
    %1168 = vmatpush1.msra.mxu0 %v440
    %1169 = vmatprep.subr.mxu0 %v409
    %1170 = vmatpush1.msra.mxu0 %v408
    %1171 = vmatprep.subr.mxu0 %v377
    %1172 = vmatpush1.msra.mxu0 %v376
    %1173 = vmatprep.subr.mxu0 %v345
    %1174 = vmatpush1.msra.mxu0 %v344
    %1175 = vmatprep.subr.mxu0 %v313
    %1176 = vmatpush1.msra.mxu0 %v312
    %1177 = vmatprep.subr.mxu0 %v281
    %1178 = vmatpush1.msra.mxu0 %v280
    %1179 = vmatprep.subr.mxu0 %v249
    %1180 = vmatpush1.msra.mxu0 %v248
    %1181 = vmatprep.subr.mxu0 %v217
    %1182 = vmatpush1.msra.mxu0 %v216
    %1183 = vmatprep.subr.mxu0 %v185
    %1184 = vmatpush1.msra.mxu0 %v184
    %1185 = vmatprep.subr.mxu0 %v153
    %1186 = vmatpush1.msra.mxu0 %v152
    %1187 = vmatprep.subr.mxu0 %v121
    %1188 = vmatpush1.msra.mxu0 %v120
    %1189 = vmatprep.subr.mxu0 %v89
    %1190 = vmatpush1.msra.mxu0 %v88
    %1191 = vmatprep.subr.mxu0 %v57
    %1192 = vmatpush1.msra.mxu0 %v56
    %1193 = vmatprep.subr.mxu0 0.0
    %1194 = vmatpush2.msra.mxu0 0.0
    %1195 = vmatprep.subr.mxu0 0.0
    %1196 = vmatpush2.msra.mxu0 0.0
    %1197 = vmatprep.subr.mxu0 0.0
    %1198 = vmatpush2.msra.mxu0 0.0
    %1199 = vmatprep.subr.mxu0 0.0
    %1200 = vmatpush2.msra.mxu0 0.0
    %1201 = vmatprep.subr.mxu0 0.0
    %1202 = vmatpush2.msra.mxu0 0.0
    %1203 = vmatprep.subr.mxu0 0.0
    %1204 = vmatpush2.msra.mxu0 0.0
    %1205 = vmatprep.subr.mxu0 0.0
    %1206 = vmatpush2.msra.mxu0 0.0
    %1207 = vmatprep.subr.mxu0 0.0
    %1208 = vmatpush2.msra.mxu0 0.0
    %1209 = vmatprep.subr.mxu0 0.0
    %1210 = vmatpush2.msra.mxu0 0.0
    %1211 = vmatprep.subr.mxu0 0.0
    %1212 = vmatpush2.msra.mxu0 0.0
    %1213 = vmatprep.subr.mxu0 0.0
    %1214 = vmatpush2.msra.mxu0 0.0
    %1215 = vmatprep.subr.mxu0 0.0
    %1216 = vmatpush2.msra.mxu0 0.0
    %1217 = vmatprep.subr.mxu0 0.0
    %1218 = vmatpush2.msra.mxu0 0.0
    %1219 = vmatprep.subr.mxu0 0.0
    %1220 = vmatpush2.msra.mxu0 0.0
    %1221 = vmatprep.subr.mxu0 %v601
    %1222 = vmatpush2.msra.mxu0 %v600
    %1223 = vmatprep.subr.mxu0 %v569
    %1224 = vmatpush2.msra.mxu0 %v568
    %1225 = vmatprep.mubr.f32.mxu0 %v794
    %1226 = vmatmul.mubr.f32.gmra.mxu0 %v40
    %v1227 = vpop.f32.mrf.mxu0
    %v1228 = vadd.f32 %v667, %v1227
    %v1229 = vpop.f32.mrf.mxu0
    %v1230 = vadd.f32 %v671, %v1229
    %1231 = vmatprep.mubr.f32.mxu0 %v797
    %1232 = vmatmul.mubr.f32.gmra.mxu0 %v42
    %v1233 = vpop.f32.mrf.mxu0
    %v1234 = vadd.f32 %v667, %v1233
    %v1235 = vpop.f32.mrf.mxu0
    %v1236 = vadd.f32 %v671, %v1235
    %1237 = vmatprep.mubr.f32.mxu0 %v800
    %1238 = vmatmul.mubr.f32.gmra.mxu0 %v44
    %v1239 = vpop.f32.mrf.mxu0
    %v1240 = vadd.f32 %v667, %v1239
    %v1241 = vpop.f32.mrf.mxu0
    %v1242 = vadd.f32 %v671, %v1241
    %1243 = vmatprep.mubr.f32.mxu0 %v803
    %1244 = vmatmul.mubr.f32.gmra.mxu0 %v46
    %v1245 = vpop.f32.mrf.mxu0
    %v1246 = vadd.f32 %v667, %v1245
    %v1247 = vpop.f32.mrf.mxu0
    %v1248 = vadd.f32 %v671, %v1247
    %1249 = vdwg.mxu0
    %1250 = vmatprep.subr.mxu0 %v539
    %1251 = vmatpush1.msra.mxu0 %v538
    %1252 = vmatprep.subr.mxu0 %v507
    %1253 = vmatpush1.msra.mxu0 %v506
    %1254 = vmatprep.subr.mxu0 %v475
    %1255 = vmatpush1.msra.mxu0 %v474
    %1256 = vmatprep.subr.mxu0 %v443
    %1257 = vmatpush1.msra.mxu0 %v442
    %1258 = vmatprep.subr.mxu0 %v411
    %1259 = vmatpush1.msra.mxu0 %v410
    %1260 = vmatprep.subr.mxu0 %v379
    %1261 = vmatpush1.msra.mxu0 %v378
    %1262 = vmatprep.subr.mxu0 %v347
    %1263 = vmatpush1.msra.mxu0 %v346
    %1264 = vmatprep.subr.mxu0 %v315
    %1265 = vmatpush1.msra.mxu0 %v314
    %1266 = vmatprep.subr.mxu0 %v283
    %1267 = vmatpush1.msra.mxu0 %v282
    %1268 = vmatprep.subr.mxu0 %v251
    %1269 = vmatpush1.msra.mxu0 %v250
    %1270 = vmatprep.subr.mxu0 %v219
    %1271 = vmatpush1.msra.mxu0 %v218
    %1272 = vmatprep.subr.mxu0 %v187
    %1273 = vmatpush1.msra.mxu0 %v186
    %1274 = vmatprep.subr.mxu0 %v155
    %1275 = vmatpush1.msra.mxu0 %v154
    %1276 = vmatprep.subr.mxu0 %v123
    %1277 = vmatpush1.msra.mxu0 %v122
    %1278 = vmatprep.subr.mxu0 %v91
    %1279 = vmatpush1.msra.mxu0 %v90
    %1280 = vmatprep.subr.mxu0 %v59
    %1281 = vmatpush1.msra.mxu0 %v58
    %1282 = vmatprep.subr.mxu0 0.0
    %1283 = vmatpush2.msra.mxu0 0.0
    %1284 = vmatprep.subr.mxu0 0.0
    %1285 = vmatpush2.msra.mxu0 0.0
    %1286 = vmatprep.subr.mxu0 0.0
    %1287 = vmatpush2.msra.mxu0 0.0
    %1288 = vmatprep.subr.mxu0 0.0
    %1289 = vmatpush2.msra.mxu0 0.0
    %1290 = vmatprep.subr.mxu0 0.0
    %1291 = vmatpush2.msra.mxu0 0.0
    %1292 = vmatprep.subr.mxu0 0.0
    %1293 = vmatpush2.msra.mxu0 0.0
    %1294 = vmatprep.subr.mxu0 0.0
    %1295 = vmatpush2.msra.mxu0 0.0
    %1296 = vmatprep.subr.mxu0 0.0
    %1297 = vmatpush2.msra.mxu0 0.0
    %1298 = vmatprep.subr.mxu0 0.0
    %1299 = vmatpush2.msra.mxu0 0.0
    %1300 = vmatprep.subr.mxu0 0.0
    %1301 = vmatpush2.msra.mxu0 0.0
    %1302 = vmatprep.subr.mxu0 0.0
    %1303 = vmatpush2.msra.mxu0 0.0
    %1304 = vmatprep.subr.mxu0 0.0
    %1305 = vmatpush2.msra.mxu0 0.0
    %1306 = vmatprep.subr.mxu0 0.0
    %1307 = vmatpush2.msra.mxu0 0.0
    %1308 = vmatprep.subr.mxu0 0.0
    %1309 = vmatpush2.msra.mxu0 0.0
    %1310 = vmatprep.subr.mxu0 %v603
    %1311 = vmatpush2.msra.mxu0 %v602
    %1312 = vmatprep.subr.mxu0 %v571
    %1313 = vmatpush2.msra.mxu0 %v570
    %1314 = vmatprep.mubr.f32.mxu0 %v794
    %1315 = vmatmul.mubr.f32.gmra.mxu0 %v40
    %v1316 = vpop.f32.mrf.mxu0
    %v1317 = vadd.f32 %v675, %v1316
    %v1318 = vpop.f32.mrf.mxu0
    %v1319 = vadd.f32 %v679, %v1318
    %1320 = vmatprep.mubr.f32.mxu0 %v797
    %1321 = vmatmul.mubr.f32.gmra.mxu0 %v42
    %v1322 = vpop.f32.mrf.mxu0
    %v1323 = vadd.f32 %v675, %v1322
    %v1324 = vpop.f32.mrf.mxu0
    %v1325 = vadd.f32 %v679, %v1324
    %1326 = vmatprep.mubr.f32.mxu0 %v800
    %1327 = vmatmul.mubr.f32.gmra.mxu0 %v44
    %v1328 = vpop.f32.mrf.mxu0
    %v1329 = vadd.f32 %v675, %v1328
    %v1330 = vpop.f32.mrf.mxu0
    %v1331 = vadd.f32 %v679, %v1330
    %1332 = vmatprep.mubr.f32.mxu0 %v803
    %1333 = vmatmul.mubr.f32.gmra.mxu0 %v46
    %v1334 = vpop.f32.mrf.mxu0
    %v1335 = vadd.f32 %v675, %v1334
    %v1336 = vpop.f32.mrf.mxu0
    %v1337 = vadd.f32 %v679, %v1336
    %1338 = vdwg.mxu0
    %1339 = vmatprep.subr.mxu0 %v541
    %1340 = vmatpush1.msra.mxu0 %v540
    %1341 = vmatprep.subr.mxu0 %v509
    %1342 = vmatpush1.msra.mxu0 %v508
    %1343 = vmatprep.subr.mxu0 %v477
    %1344 = vmatpush1.msra.mxu0 %v476
    %1345 = vmatprep.subr.mxu0 %v445
    %1346 = vmatpush1.msra.mxu0 %v444
    %1347 = vmatprep.subr.mxu0 %v413
    %1348 = vmatpush1.msra.mxu0 %v412
    %1349 = vmatprep.subr.mxu0 %v381
    %1350 = vmatpush1.msra.mxu0 %v380
    %1351 = vmatprep.subr.mxu0 %v349
    %1352 = vmatpush1.msra.mxu0 %v348
    %1353 = vmatprep.subr.mxu0 %v317
    %1354 = vmatpush1.msra.mxu0 %v316
    %1355 = vmatprep.subr.mxu0 %v285
    %1356 = vmatpush1.msra.mxu0 %v284
    %1357 = vmatprep.subr.mxu0 %v253
    %1358 = vmatpush1.msra.mxu0 %v252
    %1359 = vmatprep.subr.mxu0 %v221
    %1360 = vmatpush1.msra.mxu0 %v220
    %1361 = vmatprep.subr.mxu0 %v189
    %1362 = vmatpush1.msra.mxu0 %v188
    %1363 = vmatprep.subr.mxu0 %v157
    %1364 = vmatpush1.msra.mxu0 %v156
    %1365 = vmatprep.subr.mxu0 %v125
    %1366 = vmatpush1.msra.mxu0 %v124
    %1367 = vmatprep.subr.mxu0 %v93
    %1368 = vmatpush1.msra.mxu0 %v92
    %1369 = vmatprep.subr.mxu0 %v61
    %1370 = vmatpush1.msra.mxu0 %v60
    %1371 = vmatprep.subr.mxu0 0.0
    %1372 = vmatpush2.msra.mxu0 0.0
    %1373 = vmatprep.subr.mxu0 0.0
    %1374 = vmatpush2.msra.mxu0 0.0
    %1375 = vmatprep.subr.mxu0 0.0
    %1376 = vmatpush2.msra.mxu0 0.0
    %1377 = vmatprep.subr.mxu0 0.0
    %1378 = vmatpush2.msra.mxu0 0.0
    %1379 = vmatprep.subr.mxu0 0.0
    %1380 = vmatpush2.msra.mxu0 0.0
    %1381 = vmatprep.subr.mxu0 0.0
    %1382 = vmatpush2.msra.mxu0 0.0
    %1383 = vmatprep.subr.mxu0 0.0
    %1384 = vmatpush2.msra.mxu0 0.0
    %1385 = vmatprep.subr.mxu0 0.0
    %1386 = vmatpush2.msra.mxu0 0.0
    %1387 = vmatprep.subr.mxu0 0.0
    %1388 = vmatpush2.msra.mxu0 0.0
    %1389 = vmatprep.subr.mxu0 0.0
    %1390 = vmatpush2.msra.mxu0 0.0
    %1391 = vmatprep.subr.mxu0 0.0
    %1392 = vmatpush2.msra.mxu0 0.0
    %1393 = vmatprep.subr.mxu0 0.0
    %1394 = vmatpush2.msra.mxu0 0.0
    %1395 = vmatprep.subr.mxu0 0.0
    %1396 = vmatpush2.msra.mxu0 0.0
    %1397 = vmatprep.subr.mxu0 0.0
    %1398 = vmatpush2.msra.mxu0 0.0
    %1399 = vmatprep.subr.mxu0 %v605
    %1400 = vmatpush2.msra.mxu0 %v604
    %1401 = vmatprep.subr.mxu0 %v573
    %1402 = vmatpush2.msra.mxu0 %v572
    %1403 = vmatprep.mubr.f32.mxu0 %v794
    %1404 = vmatmul.mubr.f32.gmra.mxu0 %v40
    %v1405 = vpop.f32.mrf.mxu0
    %v1406 = vadd.f32 %v683, %v1405
    %v1407 = vpop.f32.mrf.mxu0
    %v1408 = vadd.f32 %v687, %v1407
    %1409 = vmatprep.mubr.f32.mxu0 %v797
    %1410 = vmatmul.mubr.f32.gmra.mxu0 %v42
    %v1411 = vpop.f32.mrf.mxu0
    %v1412 = vadd.f32 %v683, %v1411
    %v1413 = vpop.f32.mrf.mxu0
    %v1414 = vadd.f32 %v687, %v1413
    %1415 = vmatprep.mubr.f32.mxu0 %v800
    %1416 = vmatmul.mubr.f32.gmra.mxu0 %v44
    %v1417 = vpop.f32.mrf.mxu0
    %v1418 = vadd.f32 %v683, %v1417
    %v1419 = vpop.f32.mrf.mxu0
    %v1420 = vadd.f32 %v687, %v1419
    %1421 = vmatprep.mubr.f32.mxu0 %v803
    %1422 = vmatmul.mubr.f32.gmra.mxu0 %v46
    %v1423 = vpop.f32.mrf.mxu0
    %v1424 = vadd.f32 %v683, %v1423
    %v1425 = vpop.f32.mrf.mxu0
    %v1426 = vadd.f32 %v687, %v1425
    %1427 = vdwg.mxu0
    %1428 = vmatprep.subr.mxu0 %v543
    %1429 = vmatpush1.msra.mxu0 %v542
    %1430 = vmatprep.subr.mxu0 %v511
    %1431 = vmatpush1.msra.mxu0 %v510
    %1432 = vmatprep.subr.mxu0 %v479
    %1433 = vmatpush1.msra.mxu0 %v478
    %1434 = vmatprep.subr.mxu0 %v447
    %1435 = vmatpush1.msra.mxu0 %v446
    %1436 = vmatprep.subr.mxu0 %v415
    %1437 = vmatpush1.msra.mxu0 %v414
    %1438 = vmatprep.subr.mxu0 %v383
    %1439 = vmatpush1.msra.mxu0 %v382
    %1440 = vmatprep.subr.mxu0 %v351
    %1441 = vmatpush1.msra.mxu0 %v350
    %1442 = vmatprep.subr.mxu0 %v319
    %1443 = vmatpush1.msra.mxu0 %v318
    %1444 = vmatprep.subr.mxu0 %v287
    %1445 = vmatpush1.msra.mxu0 %v286
    %1446 = vmatprep.subr.mxu0 %v255
    %1447 = vmatpush1.msra.mxu0 %v254
    %1448 = vmatprep.subr.mxu0 %v223
    %1449 = vmatpush1.msra.mxu0 %v222
    %1450 = vmatprep.subr.mxu0 %v191
    %1451 = vmatpush1.msra.mxu0 %v190
    %1452 = vmatprep.subr.mxu0 %v159
    %1453 = vmatpush1.msra.mxu0 %v158
    %1454 = vmatprep.subr.mxu0 %v127
    %1455 = vmatpush1.msra.mxu0 %v126
    %1456 = vmatprep.subr.mxu0 %v95
    %1457 = vmatpush1.msra.mxu0 %v94
    %1458 = vmatprep.subr.mxu0 %v63
    %1459 = vmatpush1.msra.mxu0 %v62
    %1460 = vmatprep.subr.mxu0 0.0
    %1461 = vmatpush2.msra.mxu0 0.0
    %1462 = vmatprep.subr.mxu0 0.0
    %1463 = vmatpush2.msra.mxu0 0.0
    %1464 = vmatprep.subr.mxu0 0.0
    %1465 = vmatpush2.msra.mxu0 0.0
    %1466 = vmatprep.subr.mxu0 0.0
    %1467 = vmatpush2.msra.mxu0 0.0
    %1468 = vmatprep.subr.mxu0 0.0
    %1469 = vmatpush2.msra.mxu0 0.0
    %1470 = vmatprep.subr.mxu0 0.0
    %1471 = vmatpush2.msra.mxu0 0.0
    %1472 = vmatprep.subr.mxu0 0.0
    %1473 = vmatpush2.msra.mxu0 0.0
    %1474 = vmatprep.subr.mxu0 0.0
    %1475 = vmatpush2.msra.mxu0 0.0
    %1476 = vmatprep.subr.mxu0 0.0
    %1477 = vmatpush2.msra.mxu0 0.0
    %1478 = vmatprep.subr.mxu0 0.0
    %1479 = vmatpush2.msra.mxu0 0.0
    %1480 = vmatprep.subr.mxu0 0.0
    %1481 = vmatpush2.msra.mxu0 0.0
    %1482 = vmatprep.subr.mxu0 0.0
    %1483 = vmatpush2.msra.mxu0 0.0
    %1484 = vmatprep.subr.mxu0 0.0
    %1485 = vmatpush2.msra.mxu0 0.0
    %1486 = vmatprep.subr.mxu0 0.0
    %1487 = vmatpush2.msra.mxu0 0.0
    %1488 = vmatprep.subr.mxu0 %v607
    %1489 = vmatpush2.msra.mxu0 %v606
    %1490 = vmatprep.subr.mxu0 %v575
    %1491 = vmatpush2.msra.mxu0 %v574
    %1492 = vmatprep.mubr.f32.mxu0 %v794
    %1493 = vmatmul.mubr.f32.gmra.mxu0 %v40
    %v1494 = vpop.f32.mrf.mxu0
    %v1495 = vadd.f32 %v691, %v1494
    %v1496 = vpop.f32.mrf.mxu0
    %v1497 = vadd.f32 %v695, %v1496
    %1498 = vmatprep.mubr.f32.mxu0 %v797
    %1499 = vmatmul.mubr.f32.gmra.mxu0 %v42
    %v1500 = vpop.f32.mrf.mxu0
    %v1501 = vadd.f32 %v691, %v1500
    %v1502 = vpop.f32.mrf.mxu0
    %v1503 = vadd.f32 %v695, %v1502
    %1504 = vmatprep.mubr.f32.mxu0 %v800
    %1505 = vmatmul.mubr.f32.gmra.mxu0 %v44
    %v1506 = vpop.f32.mrf.mxu0
    %v1507 = vadd.f32 %v691, %v1506
    %v1508 = vpop.f32.mrf.mxu0
    %v1509 = vadd.f32 %v695, %v1508
    %1510 = vmatprep.mubr.f32.mxu0 %v803
    %1511 = vmatmul.mubr.f32.gmra.mxu0 %v46
    %v1512 = vpop.f32.mrf.mxu0
    %v1513 = vadd.f32 %v691, %v1512
    %v1514 = vpop.f32.mrf.mxu0
    %v1515 = vadd.f32 %v695, %v1514
    %1516 = vdwg.mxu0
    %1517 = vmatprep.subr.mxu0 %v545
    %1518 = vmatpush1.msra.mxu0 %v544
    %1519 = vmatprep.subr.mxu0 %v513
    %1520 = vmatpush1.msra.mxu0 %v512
    %1521 = vmatprep.subr.mxu0 %v481
    %1522 = vmatpush1.msra.mxu0 %v480
    %1523 = vmatprep.subr.mxu0 %v449
    %1524 = vmatpush1.msra.mxu0 %v448
    %1525 = vmatprep.subr.mxu0 %v417
    %1526 = vmatpush1.msra.mxu0 %v416
    %1527 = vmatprep.subr.mxu0 %v385
    %1528 = vmatpush1.msra.mxu0 %v384
    %1529 = vmatprep.subr.mxu0 %v353
    %1530 = vmatpush1.msra.mxu0 %v352
    %1531 = vmatprep.subr.mxu0 %v321
    %1532 = vmatpush1.msra.mxu0 %v320
    %1533 = vmatprep.subr.mxu0 %v289
    %1534 = vmatpush1.msra.mxu0 %v288
    %1535 = vmatprep.subr.mxu0 %v257
    %1536 = vmatpush1.msra.mxu0 %v256
    %1537 = vmatprep.subr.mxu0 %v225
    %1538 = vmatpush1.msra.mxu0 %v224
    %1539 = vmatprep.subr.mxu0 %v193
    %1540 = vmatpush1.msra.mxu0 %v192
    %1541 = vmatprep.subr.mxu0 %v161
    %1542 = vmatpush1.msra.mxu0 %v160
    %1543 = vmatprep.subr.mxu0 %v129
    %1544 = vmatpush1.msra.mxu0 %v128
    %1545 = vmatprep.subr.mxu0 %v97
    %1546 = vmatpush1.msra.mxu0 %v96
    %1547 = vmatprep.subr.mxu0 %v65
    %1548 = vmatpush1.msra.mxu0 %v64
    %1549 = vmatprep.subr.mxu0 0.0
    %1550 = vmatpush2.msra.mxu0 0.0
    %1551 = vmatprep.subr.mxu0 0.0
    %1552 = vmatpush2.msra.mxu0 0.0
    %1553 = vmatprep.subr.mxu0 0.0
    %1554 = vmatpush2.msra.mxu0 0.0
    %1555 = vmatprep.subr.mxu0 0.0
    %1556 = vmatpush2.msra.mxu0 0.0
    %1557 = vmatprep.subr.mxu0 0.0
    %1558 = vmatpush2.msra.mxu0 0.0
    %1559 = vmatprep.subr.mxu0 0.0
    %1560 = vmatpush2.msra.mxu0 0.0
    %1561 = vmatprep.subr.mxu0 0.0
    %1562 = vmatpush2.msra.mxu0 0.0
    %1563 = vmatprep.subr.mxu0 0.0
    %1564 = vmatpush2.msra.mxu0 0.0
    %1565 = vmatprep.subr.mxu0 0.0
    %1566 = vmatpush2.msra.mxu0 0.0
    %1567 = vmatprep.subr.mxu0 0.0
    %1568 = vmatpush2.msra.mxu0 0.0
    %1569 = vmatprep.subr.mxu0 0.0
    %1570 = vmatpush2.msra.mxu0 0.0
    %1571 = vmatprep.subr.mxu0 0.0
    %1572 = vmatpush2.msra.mxu0 0.0
    %1573 = vmatprep.subr.mxu0 0.0
    %1574 = vmatpush2.msra.mxu0 0.0
    %1575 = vmatprep.subr.mxu0 0.0
    %1576 = vmatpush2.msra.mxu0 0.0
    %1577 = vmatprep.subr.mxu0 %v609
    %1578 = vmatpush2.msra.mxu0 %v608
    %1579 = vmatprep.subr.mxu0 %v577
    %1580 = vmatpush2.msra.mxu0 %v576
    %1581 = vmatprep.mubr.f32.mxu0 %v794
    %1582 = vmatmul.mubr.f32.gmra.mxu0 %v40
    %v1583 = vpop.f32.mrf.mxu0
    %v1584 = vadd.f32 %v699, %v1583
    %v1585 = vpop.f32.mrf.mxu0
    %v1586 = vadd.f32 %v703, %v1585
    %1587 = vmatprep.mubr.f32.mxu0 %v797
    %1588 = vmatmul.mubr.f32.gmra.mxu0 %v42
    %v1589 = vpop.f32.mrf.mxu0
    %v1590 = vadd.f32 %v699, %v1589
    %v1591 = vpop.f32.mrf.mxu0
    %v1592 = vadd.f32 %v703, %v1591
    %1593 = vmatprep.mubr.f32.mxu0 %v800
    %1594 = vmatmul.mubr.f32.gmra.mxu0 %v44
    %v1595 = vpop.f32.mrf.mxu0
    %v1596 = vadd.f32 %v699, %v1595
    %v1597 = vpop.f32.mrf.mxu0
    %v1598 = vadd.f32 %v703, %v1597
    %1599 = vmatprep.mubr.f32.mxu0 %v803
    %1600 = vmatmul.mubr.f32.gmra.mxu0 %v46
    %v1601 = vpop.f32.mrf.mxu0
    %v1602 = vadd.f32 %v699, %v1601
    %v1603 = vpop.f32.mrf.mxu0
    %v1604 = vadd.f32 %v703, %v1603
    %1605 = vdwg.mxu0
    %1606 = vmatprep.subr.mxu0 %v547
    %1607 = vmatpush1.msra.mxu0 %v546
    %1608 = vmatprep.subr.mxu0 %v515
    %1609 = vmatpush1.msra.mxu0 %v514
    %1610 = vmatprep.subr.mxu0 %v483
    %1611 = vmatpush1.msra.mxu0 %v482
    %1612 = vmatprep.subr.mxu0 %v451
    %1613 = vmatpush1.msra.mxu0 %v450
    %1614 = vmatprep.subr.mxu0 %v419
    %1615 = vmatpush1.msra.mxu0 %v418
    %1616 = vmatprep.subr.mxu0 %v387
    %1617 = vmatpush1.msra.mxu0 %v386
    %1618 = vmatprep.subr.mxu0 %v355
    %1619 = vmatpush1.msra.mxu0 %v354
    %1620 = vmatprep.subr.mxu0 %v323
    %1621 = vmatpush1.msra.mxu0 %v322
    %1622 = vmatprep.subr.mxu0 %v291
    %1623 = vmatpush1.msra.mxu0 %v290
    %1624 = vmatprep.subr.mxu0 %v259
    %1625 = vmatpush1.msra.mxu0 %v258
    %1626 = vmatprep.subr.mxu0 %v227
    %1627 = vmatpush1.msra.mxu0 %v226
    %1628 = vmatprep.subr.mxu0 %v195
    %1629 = vmatpush1.msra.mxu0 %v194
    %1630 = vmatprep.subr.mxu0 %v163
    %1631 = vmatpush1.msra.mxu0 %v162
    %1632 = vmatprep.subr.mxu0 %v131
    %1633 = vmatpush1.msra.mxu0 %v130
    %1634 = vmatprep.subr.mxu0 %v99
    %1635 = vmatpush1.msra.mxu0 %v98
    %1636 = vmatprep.subr.mxu0 %v67
    %1637 = vmatpush1.msra.mxu0 %v66
    %1638 = vmatprep.subr.mxu0 0.0
    %1639 = vmatpush2.msra.mxu0 0.0
    %1640 = vmatprep.subr.mxu0 0.0
    %1641 = vmatpush2.msra.mxu0 0.0
    %1642 = vmatprep.subr.mxu0 0.0
    %1643 = vmatpush2.msra.mxu0 0.0
    %1644 = vmatprep.subr.mxu0 0.0
    %1645 = vmatpush2.msra.mxu0 0.0
    %1646 = vmatprep.subr.mxu0 0.0
    %1647 = vmatpush2.msra.mxu0 0.0
    %1648 = vmatprep.subr.mxu0 0.0
    %1649 = vmatpush2.msra.mxu0 0.0
    %1650 = vmatprep.subr.mxu0 0.0
    %1651 = vmatpush2.msra.mxu0 0.0
    %1652 = vmatprep.subr.mxu0 0.0
    %1653 = vmatpush2.msra.mxu0 0.0
    %1654 = vmatprep.subr.mxu0 0.0
    %1655 = vmatpush2.msra.mxu0 0.0
    %1656 = vmatprep.subr.mxu0 0.0
    %1657 = vmatpush2.msra.mxu0 0.0
    %1658 = vmatprep.subr.mxu0 0.0
    %1659 = vmatpush2.msra.mxu0 0.0
    %1660 = vmatprep.subr.mxu0 0.0
    %1661 = vmatpush2.msra.mxu0 0.0
    %1662 = vmatprep.subr.mxu0 0.0
    %1663 = vmatpush2.msra.mxu0 0.0
    %1664 = vmatprep.subr.mxu0 0.0
    %1665 = vmatpush2.msra.mxu0 0.0
    %1666 = vmatprep.subr.mxu0 %v611
    %1667 = vmatpush2.msra.mxu0 %v610
    %1668 = vmatprep.subr.mxu0 %v579
    %1669 = vmatpush2.msra.mxu0 %v578
    %1670 = vmatprep.mubr.f32.mxu0 %v794
    %1671 = vmatmul.mubr.f32.gmra.mxu0 %v40
    %v1672 = vpop.f32.mrf.mxu0
    %v1673 = vadd.f32 %v707, %v1672
    %v1674 = vpop.f32.mrf.mxu0
    %v1675 = vadd.f32 %v711, %v1674
    %1676 = vmatprep.mubr.f32.mxu0 %v797
    %1677 = vmatmul.mubr.f32.gmra.mxu0 %v42
    %v1678 = vpop.f32.mrf.mxu0
    %v1679 = vadd.f32 %v707, %v1678
    %v1680 = vpop.f32.mrf.mxu0
    %v1681 = vadd.f32 %v711, %v1680
    %1682 = vmatprep.mubr.f32.mxu0 %v800
    %1683 = vmatmul.mubr.f32.gmra.mxu0 %v44
    %v1684 = vpop.f32.mrf.mxu0
    %v1685 = vadd.f32 %v707, %v1684
    %v1686 = vpop.f32.mrf.mxu0
    %v1687 = vadd.f32 %v711, %v1686
    %1688 = vmatprep.mubr.f32.mxu0 %v803
    %1689 = vmatmul.mubr.f32.gmra.mxu0 %v46
    %v1690 = vpop.f32.mrf.mxu0
    %v1691 = vadd.f32 %v707, %v1690
    %v1692 = vpop.f32.mrf.mxu0
    %v1693 = vadd.f32 %v711, %v1692
    %1694 = vdwg.mxu0
    %1695 = vmatprep.subr.mxu0 %v549
    %1696 = vmatpush1.msra.mxu0 %v548
    %1697 = vmatprep.subr.mxu0 %v517
    %1698 = vmatpush1.msra.mxu0 %v516
    %1699 = vmatprep.subr.mxu0 %v485
    %1700 = vmatpush1.msra.mxu0 %v484
    %1701 = vmatprep.subr.mxu0 %v453
    %1702 = vmatpush1.msra.mxu0 %v452
    %1703 = vmatprep.subr.mxu0 %v421
    %1704 = vmatpush1.msra.mxu0 %v420
    %1705 = vmatprep.subr.mxu0 %v389
    %1706 = vmatpush1.msra.mxu0 %v388
    %1707 = vmatprep.subr.mxu0 %v357
    %1708 = vmatpush1.msra.mxu0 %v356
    %1709 = vmatprep.subr.mxu0 %v325
    %1710 = vmatpush1.msra.mxu0 %v324
    %1711 = vmatprep.subr.mxu0 %v293
    %1712 = vmatpush1.msra.mxu0 %v292
    %1713 = vmatprep.subr.mxu0 %v261
    %1714 = vmatpush1.msra.mxu0 %v260
    %1715 = vmatprep.subr.mxu0 %v229
    %1716 = vmatpush1.msra.mxu0 %v228
    %1717 = vmatprep.subr.mxu0 %v197
    %1718 = vmatpush1.msra.mxu0 %v196
    %1719 = vmatprep.subr.mxu0 %v165
    %1720 = vmatpush1.msra.mxu0 %v164
    %1721 = vmatprep.subr.mxu0 %v133
    %1722 = vmatpush1.msra.mxu0 %v132
    %1723 = vmatprep.subr.mxu0 %v101
    %1724 = vmatpush1.msra.mxu0 %v100
    %1725 = vmatprep.subr.mxu0 %v69
    %1726 = vmatpush1.msra.mxu0 %v68
    %1727 = vmatprep.subr.mxu0 0.0
    %1728 = vmatpush2.msra.mxu0 0.0
    %1729 = vmatprep.subr.mxu0 0.0
    %1730 = vmatpush2.msra.mxu0 0.0
    %1731 = vmatprep.subr.mxu0 0.0
    %1732 = vmatpush2.msra.mxu0 0.0
    %1733 = vmatprep.subr.mxu0 0.0
    %1734 = vmatpush2.msra.mxu0 0.0
    %1735 = vmatprep.subr.mxu0 0.0
    %1736 = vmatpush2.msra.mxu0 0.0
    %1737 = vmatprep.subr.mxu0 0.0
    %1738 = vmatpush2.msra.mxu0 0.0
    %1739 = vmatprep.subr.mxu0 0.0
    %1740 = vmatpush2.msra.mxu0 0.0
    %1741 = vmatprep.subr.mxu0 0.0
    %1742 = vmatpush2.msra.mxu0 0.0
    %1743 = vmatprep.subr.mxu0 0.0
    %1744 = vmatpush2.msra.mxu0 0.0
    %1745 = vmatprep.subr.mxu0 0.0
    %1746 = vmatpush2.msra.mxu0 0.0
    %1747 = vmatprep.subr.mxu0 0.0
    %1748 = vmatpush2.msra.mxu0 0.0
    %1749 = vmatprep.subr.mxu0 0.0
    %1750 = vmatpush2.msra.mxu0 0.0
    %1751 = vmatprep.subr.mxu0 0.0
    %1752 = vmatpush2.msra.mxu0 0.0
    %1753 = vmatprep.subr.mxu0 0.0
    %1754 = vmatpush2.msra.mxu0 0.0
    %1755 = vmatprep.subr.mxu0 %v613
    %1756 = vmatpush2.msra.mxu0 %v612
    %1757 = vmatprep.subr.mxu0 %v581
    %1758 = vmatpush2.msra.mxu0 %v580
    %1759 = vmatprep.mubr.f32.mxu0 %v794
    %1760 = vmatmul.mubr.f32.gmra.mxu0 %v40
    %v1761 = vpop.f32.mrf.mxu0
    %v1762 = vadd.f32 %v715, %v1761
    %v1763 = vpop.f32.mrf.mxu0
    %v1764 = vadd.f32 %v719, %v1763
    %1765 = vmatprep.mubr.f32.mxu0 %v797
    %1766 = vmatmul.mubr.f32.gmra.mxu0 %v42
    %v1767 = vpop.f32.mrf.mxu0
    %v1768 = vadd.f32 %v715, %v1767
    %v1769 = vpop.f32.mrf.mxu0
    %v1770 = vadd.f32 %v719, %v1769
    %1771 = vmatprep.mubr.f32.mxu0 %v800
    %1772 = vmatmul.mubr.f32.gmra.mxu0 %v44
    %v1773 = vpop.f32.mrf.mxu0
    %v1774 = vadd.f32 %v715, %v1773
    %v1775 = vpop.f32.mrf.mxu0
    %v1776 = vadd.f32 %v719, %v1775
    %1777 = vmatprep.mubr.f32.mxu0 %v803
    %1778 = vmatmul.mubr.f32.gmra.mxu0 %v46
    %v1779 = vpop.f32.mrf.mxu0
    %v1780 = vadd.f32 %v715, %v1779
    %v1781 = vpop.f32.mrf.mxu0
    %v1782 = vadd.f32 %v719, %v1781
    %1783 = vdwg.mxu0
    %1784 = vmatprep.subr.mxu0 %v551
    %1785 = vmatpush1.msra.mxu0 %v550
    %1786 = vmatprep.subr.mxu0 %v519
    %1787 = vmatpush1.msra.mxu0 %v518
    %1788 = vmatprep.subr.mxu0 %v487
    %1789 = vmatpush1.msra.mxu0 %v486
    %1790 = vmatprep.subr.mxu0 %v455
    %1791 = vmatpush1.msra.mxu0 %v454
    %1792 = vmatprep.subr.mxu0 %v423
    %1793 = vmatpush1.msra.mxu0 %v422
    %1794 = vmatprep.subr.mxu0 %v391
    %1795 = vmatpush1.msra.mxu0 %v390
    %1796 = vmatprep.subr.mxu0 %v359
    %1797 = vmatpush1.msra.mxu0 %v358
    %1798 = vmatprep.subr.mxu0 %v327
    %1799 = vmatpush1.msra.mxu0 %v326
    %1800 = vmatprep.subr.mxu0 %v295
    %1801 = vmatpush1.msra.mxu0 %v294
    %1802 = vmatprep.subr.mxu0 %v263
    %1803 = vmatpush1.msra.mxu0 %v262
    %1804 = vmatprep.subr.mxu0 %v231
    %1805 = vmatpush1.msra.mxu0 %v230
    %1806 = vmatprep.subr.mxu0 %v199
    %1807 = vmatpush1.msra.mxu0 %v198
    %1808 = vmatprep.subr.mxu0 %v167
    %1809 = vmatpush1.msra.mxu0 %v166
    %1810 = vmatprep.subr.mxu0 %v135
    %1811 = vmatpush1.msra.mxu0 %v134
    %1812 = vmatprep.subr.mxu0 %v103
    %1813 = vmatpush1.msra.mxu0 %v102
    %1814 = vmatprep.subr.mxu0 %v71
    %1815 = vmatpush1.msra.mxu0 %v70
    %1816 = vmatprep.subr.mxu0 0.0
    %1817 = vmatpush2.msra.mxu0 0.0
    %1818 = vmatprep.subr.mxu0 0.0
    %1819 = vmatpush2.msra.mxu0 0.0
    %1820 = vmatprep.subr.mxu0 0.0
    %1821 = vmatpush2.msra.mxu0 0.0
    %1822 = vmatprep.subr.mxu0 0.0
    %1823 = vmatpush2.msra.mxu0 0.0
    %1824 = vmatprep.subr.mxu0 0.0
    %1825 = vmatpush2.msra.mxu0 0.0
    %1826 = vmatprep.subr.mxu0 0.0
    %1827 = vmatpush2.msra.mxu0 0.0
    %1828 = vmatprep.subr.mxu0 0.0
    %1829 = vmatpush2.msra.mxu0 0.0
    %1830 = vmatprep.subr.mxu0 0.0
    %1831 = vmatpush2.msra.mxu0 0.0
    %1832 = vmatprep.subr.mxu0 0.0
    %1833 = vmatpush2.msra.mxu0 0.0
    %1834 = vmatprep.subr.mxu0 0.0
    %1835 = vmatpush2.msra.mxu0 0.0
    %1836 = vmatprep.subr.mxu0 0.0
    %1837 = vmatpush2.msra.mxu0 0.0
    %1838 = vmatprep.subr.mxu0 0.0
    %1839 = vmatpush2.msra.mxu0 0.0
    %1840 = vmatprep.subr.mxu0 0.0
    %1841 = vmatpush2.msra.mxu0 0.0
    %1842 = vmatprep.subr.mxu0 0.0
    %1843 = vmatpush2.msra.mxu0 0.0
    %1844 = vmatprep.subr.mxu0 %v615
    %1845 = vmatpush2.msra.mxu0 %v614
    %1846 = vmatprep.subr.mxu0 %v583
    %1847 = vmatpush2.msra.mxu0 %v582
    %1848 = vmatprep.mubr.f32.mxu0 %v794
    %1849 = vmatmul.mubr.f32.gmra.mxu0 %v40
    %v1850 = vpop.f32.mrf.mxu0
    %v1851 = vadd.f32 %v723, %v1850
    %v1852 = vpop.f32.mrf.mxu0
    %v1853 = vadd.f32 %v727, %v1852
    %1854 = vmatprep.mubr.f32.mxu0 %v797
    %1855 = vmatmul.mubr.f32.gmra.mxu0 %v42
    %v1856 = vpop.f32.mrf.mxu0
    %v1857 = vadd.f32 %v723, %v1856
    %v1858 = vpop.f32.mrf.mxu0
    %v1859 = vadd.f32 %v727, %v1858
    %1860 = vmatprep.mubr.f32.mxu0 %v800
    %1861 = vmatmul.mubr.f32.gmra.mxu0 %v44
    %v1862 = vpop.f32.mrf.mxu0
    %v1863 = vadd.f32 %v723, %v1862
    %v1864 = vpop.f32.mrf.mxu0
    %v1865 = vadd.f32 %v727, %v1864
    %1866 = vmatprep.mubr.f32.mxu0 %v803
    %1867 = vmatmul.mubr.f32.gmra.mxu0 %v46
    %v1868 = vpop.f32.mrf.mxu0
    %v1869 = vadd.f32 %v723, %v1868
    %v1870 = vpop.f32.mrf.mxu0
    %v1871 = vadd.f32 %v727, %v1870
    %1872 = vdwg.mxu0
    %1873 = vmatprep.subr.mxu0 %v553
    %1874 = vmatpush1.msra.mxu0 %v552
    %1875 = vmatprep.subr.mxu0 %v521
    %1876 = vmatpush1.msra.mxu0 %v520
    %1877 = vmatprep.subr.mxu0 %v489
    %1878 = vmatpush1.msra.mxu0 %v488
    %1879 = vmatprep.subr.mxu0 %v457
    %1880 = vmatpush1.msra.mxu0 %v456
    %1881 = vmatprep.subr.mxu0 %v425
    %1882 = vmatpush1.msra.mxu0 %v424
    %1883 = vmatprep.subr.mxu0 %v393
    %1884 = vmatpush1.msra.mxu0 %v392
    %1885 = vmatprep.subr.mxu0 %v361
    %1886 = vmatpush1.msra.mxu0 %v360
    %1887 = vmatprep.subr.mxu0 %v329
    %1888 = vmatpush1.msra.mxu0 %v328
    %1889 = vmatprep.subr.mxu0 %v297
    %1890 = vmatpush1.msra.mxu0 %v296
    %1891 = vmatprep.subr.mxu0 %v265
    %1892 = vmatpush1.msra.mxu0 %v264
    %1893 = vmatprep.subr.mxu0 %v233
    %1894 = vmatpush1.msra.mxu0 %v232
    %1895 = vmatprep.subr.mxu0 %v201
    %1896 = vmatpush1.msra.mxu0 %v200
    %1897 = vmatprep.subr.mxu0 %v169
    %1898 = vmatpush1.msra.mxu0 %v168
    %1899 = vmatprep.subr.mxu0 %v137
    %1900 = vmatpush1.msra.mxu0 %v136
    %1901 = vmatprep.subr.mxu0 %v105
    %1902 = vmatpush1.msra.mxu0 %v104
    %1903 = vmatprep.subr.mxu0 %v73
    %1904 = vmatpush1.msra.mxu0 %v72
    %1905 = vmatprep.subr.mxu0 0.0
    %1906 = vmatpush2.msra.mxu0 0.0
    %1907 = vmatprep.subr.mxu0 0.0
    %1908 = vmatpush2.msra.mxu0 0.0
    %1909 = vmatprep.subr.mxu0 0.0
    %1910 = vmatpush2.msra.mxu0 0.0
    %1911 = vmatprep.subr.mxu0 0.0
    %1912 = vmatpush2.msra.mxu0 0.0
    %1913 = vmatprep.subr.mxu0 0.0
    %1914 = vmatpush2.msra.mxu0 0.0
    %1915 = vmatprep.subr.mxu0 0.0
    %1916 = vmatpush2.msra.mxu0 0.0
    %1917 = vmatprep.subr.mxu0 0.0
    %1918 = vmatpush2.msra.mxu0 0.0
    %1919 = vmatprep.subr.mxu0 0.0
    %1920 = vmatpush2.msra.mxu0 0.0
    %1921 = vmatprep.subr.mxu0 0.0
    %1922 = vmatpush2.msra.mxu0 0.0
    %1923 = vmatprep.subr.mxu0 0.0
    %1924 = vmatpush2.msra.mxu0 0.0
    %1925 = vmatprep.subr.mxu0 0.0
    %1926 = vmatpush2.msra.mxu0 0.0
    %1927 = vmatprep.subr.mxu0 0.0
    %1928 = vmatpush2.msra.mxu0 0.0
    %1929 = vmatprep.subr.mxu0 0.0
    %1930 = vmatpush2.msra.mxu0 0.0
    %1931 = vmatprep.subr.mxu0 0.0
    %1932 = vmatpush2.msra.mxu0 0.0
    %1933 = vmatprep.subr.mxu0 %v617
    %1934 = vmatpush2.msra.mxu0 %v616
    %1935 = vmatprep.subr.mxu0 %v585
    %1936 = vmatpush2.msra.mxu0 %v584
    %1937 = vmatprep.mubr.f32.mxu0 %v794
    %1938 = vmatmul.mubr.f32.gmra.mxu0 %v40
    %v1939 = vpop.f32.mrf.mxu0
    %v1940 = vadd.f32 %v731, %v1939
    %v1941 = vpop.f32.mrf.mxu0
    %v1942 = vadd.f32 %v735, %v1941
    %1943 = vmatprep.mubr.f32.mxu0 %v797
    %1944 = vmatmul.mubr.f32.gmra.mxu0 %v42
    %v1945 = vpop.f32.mrf.mxu0
    %v1946 = vadd.f32 %v731, %v1945
    %v1947 = vpop.f32.mrf.mxu0
    %v1948 = vadd.f32 %v735, %v1947
    %1949 = vmatprep.mubr.f32.mxu0 %v800
    %1950 = vmatmul.mubr.f32.gmra.mxu0 %v44
    %v1951 = vpop.f32.mrf.mxu0
    %v1952 = vadd.f32 %v731, %v1951
    %v1953 = vpop.f32.mrf.mxu0
    %v1954 = vadd.f32 %v735, %v1953
    %1955 = vmatprep.mubr.f32.mxu0 %v803
    %1956 = vmatmul.mubr.f32.gmra.mxu0 %v46
    %v1957 = vpop.f32.mrf.mxu0
    %v1958 = vadd.f32 %v731, %v1957
    %v1959 = vpop.f32.mrf.mxu0
    %v1960 = vadd.f32 %v735, %v1959
    %1961 = vdwg.mxu0
    %1962 = vmatprep.subr.mxu0 %v555
    %1963 = vmatpush1.msra.mxu0 %v554
    %1964 = vmatprep.subr.mxu0 %v523
    %1965 = vmatpush1.msra.mxu0 %v522
    %1966 = vmatprep.subr.mxu0 %v491
    %1967 = vmatpush1.msra.mxu0 %v490
    %1968 = vmatprep.subr.mxu0 %v459
    %1969 = vmatpush1.msra.mxu0 %v458
    %1970 = vmatprep.subr.mxu0 %v427
    %1971 = vmatpush1.msra.mxu0 %v426
    %1972 = vmatprep.subr.mxu0 %v395
    %1973 = vmatpush1.msra.mxu0 %v394
    %1974 = vmatprep.subr.mxu0 %v363
    %1975 = vmatpush1.msra.mxu0 %v362
    %1976 = vmatprep.subr.mxu0 %v331
    %1977 = vmatpush1.msra.mxu0 %v330
    %1978 = vmatprep.subr.mxu0 %v299
    %1979 = vmatpush1.msra.mxu0 %v298
    %1980 = vmatprep.subr.mxu0 %v267
    %1981 = vmatpush1.msra.mxu0 %v266
    %1982 = vmatprep.subr.mxu0 %v235
    %1983 = vmatpush1.msra.mxu0 %v234
    %1984 = vmatprep.subr.mxu0 %v203
    %1985 = vmatpush1.msra.mxu0 %v202
    %1986 = vmatprep.subr.mxu0 %v171
    %1987 = vmatpush1.msra.mxu0 %v170
    %1988 = vmatprep.subr.mxu0 %v139
    %1989 = vmatpush1.msra.mxu0 %v138
    %1990 = vmatprep.subr.mxu0 %v107
    %1991 = vmatpush1.msra.mxu0 %v106
    %1992 = vmatprep.subr.mxu0 %v75
    %1993 = vmatpush1.msra.mxu0 %v74
    %1994 = vmatprep.subr.mxu0 0.0
    %1995 = vmatpush2.msra.mxu0 0.0
    %1996 = vmatprep.subr.mxu0 0.0
    %1997 = vmatpush2.msra.mxu0 0.0
    %1998 = vmatprep.subr.mxu0 0.0
    %1999 = vmatpush2.msra.mxu0 0.0
    %2000 = vmatprep.subr.mxu0 0.0
    %2001 = vmatpush2.msra.mxu0 0.0
    %2002 = vmatprep.subr.mxu0 0.0
    %2003 = vmatpush2.msra.mxu0 0.0
    %2004 = vmatprep.subr.mxu0 0.0
    %2005 = vmatpush2.msra.mxu0 0.0
    %2006 = vmatprep.subr.mxu0 0.0
    %2007 = vmatpush2.msra.mxu0 0.0
    %2008 = vmatprep.subr.mxu0 0.0
    %2009 = vmatpush2.msra.mxu0 0.0
    %2010 = vmatprep.subr.mxu0 0.0
    %2011 = vmatpush2.msra.mxu0 0.0
    %2012 = vmatprep.subr.mxu0 0.0
    %2013 = vmatpush2.msra.mxu0 0.0
    %2014 = vmatprep.subr.mxu0 0.0
    %2015 = vmatpush2.msra.mxu0 0.0
    %2016 = vmatprep.subr.mxu0 0.0
    %2017 = vmatpush2.msra.mxu0 0.0
    %2018 = vmatprep.subr.mxu0 0.0
    %2019 = vmatpush2.msra.mxu0 0.0
    %2020 = vmatprep.subr.mxu0 0.0
    %2021 = vmatpush2.msra.mxu0 0.0
    %2022 = vmatprep.subr.mxu0 %v619
    %2023 = vmatpush2.msra.mxu0 %v618
    %2024 = vmatprep.subr.mxu0 %v587
    %2025 = vmatpush2.msra.mxu0 %v586
    %2026 = vmatprep.mubr.f32.mxu0 %v794
    %2027 = vmatmul.mubr.f32.gmra.mxu0 %v40
    %v2028 = vpop.f32.mrf.mxu0
    %v2029 = vadd.f32 %v739, %v2028
    %v2030 = vpop.f32.mrf.mxu0
    %v2031 = vadd.f32 %v743, %v2030
    %2032 = vmatprep.mubr.f32.mxu0 %v797
    %2033 = vmatmul.mubr.f32.gmra.mxu0 %v42
    %v2034 = vpop.f32.mrf.mxu0
    %v2035 = vadd.f32 %v739, %v2034
    %v2036 = vpop.f32.mrf.mxu0
    %v2037 = vadd.f32 %v743, %v2036
    %2038 = vmatprep.mubr.f32.mxu0 %v800
    %2039 = vmatmul.mubr.f32.gmra.mxu0 %v44
    %v2040 = vpop.f32.mrf.mxu0
    %v2041 = vadd.f32 %v739, %v2040
    %v2042 = vpop.f32.mrf.mxu0
    %v2043 = vadd.f32 %v743, %v2042
    %2044 = vmatprep.mubr.f32.mxu0 %v803
    %2045 = vmatmul.mubr.f32.gmra.mxu0 %v46
    %v2046 = vpop.f32.mrf.mxu0
    %v2047 = vadd.f32 %v739, %v2046
    %v2048 = vpop.f32.mrf.mxu0
    %v2049 = vadd.f32 %v743, %v2048
    %2050 = vdwg.mxu0
    %2051 = vmatprep.subr.mxu0 %v557
    %2052 = vmatpush1.msra.mxu0 %v556
    %2053 = vmatprep.subr.mxu0 %v525
    %2054 = vmatpush1.msra.mxu0 %v524
    %2055 = vmatprep.subr.mxu0 %v493
    %2056 = vmatpush1.msra.mxu0 %v492
    %2057 = vmatprep.subr.mxu0 %v461
    %2058 = vmatpush1.msra.mxu0 %v460
    %2059 = vmatprep.subr.mxu0 %v429
    %2060 = vmatpush1.msra.mxu0 %v428
    %2061 = vmatprep.subr.mxu0 %v397
    %2062 = vmatpush1.msra.mxu0 %v396
    %2063 = vmatprep.subr.mxu0 %v365
    %2064 = vmatpush1.msra.mxu0 %v364
    %2065 = vmatprep.subr.mxu0 %v333
    %2066 = vmatpush1.msra.mxu0 %v332
    %2067 = vmatprep.subr.mxu0 %v301
    %2068 = vmatpush1.msra.mxu0 %v300
    %2069 = vmatprep.subr.mxu0 %v269
    %2070 = vmatpush1.msra.mxu0 %v268
    %2071 = vmatprep.subr.mxu0 %v237
    %2072 = vmatpush1.msra.mxu0 %v236
    %2073 = vmatprep.subr.mxu0 %v205
    %2074 = vmatpush1.msra.mxu0 %v204
    %2075 = vmatprep.subr.mxu0 %v173
    %2076 = vmatpush1.msra.mxu0 %v172
    %2077 = vmatprep.subr.mxu0 %v141
    %2078 = vmatpush1.msra.mxu0 %v140
    %2079 = vmatprep.subr.mxu0 %v109
    %2080 = vmatpush1.msra.mxu0 %v108
    %2081 = vmatprep.subr.mxu0 %v77
    %2082 = vmatpush1.msra.mxu0 %v76
    %2083 = vmatprep.subr.mxu0 0.0
    %2084 = vmatpush2.msra.mxu0 0.0
    %2085 = vmatprep.subr.mxu0 0.0
    %2086 = vmatpush2.msra.mxu0 0.0
    %2087 = vmatprep.subr.mxu0 0.0
    %2088 = vmatpush2.msra.mxu0 0.0
    %2089 = vmatprep.subr.mxu0 0.0
    %2090 = vmatpush2.msra.mxu0 0.0
    %2091 = vmatprep.subr.mxu0 0.0
    %2092 = vmatpush2.msra.mxu0 0.0
    %2093 = vmatprep.subr.mxu0 0.0
    %2094 = vmatpush2.msra.mxu0 0.0
    %2095 = vmatprep.subr.mxu0 0.0
    %2096 = vmatpush2.msra.mxu0 0.0
    %2097 = vmatprep.subr.mxu0 0.0
    %2098 = vmatpush2.msra.mxu0 0.0
    %2099 = vmatprep.subr.mxu0 0.0
    %2100 = vmatpush2.msra.mxu0 0.0
    %2101 = vmatprep.subr.mxu0 0.0
    %2102 = vmatpush2.msra.mxu0 0.0
    %2103 = vmatprep.subr.mxu0 0.0
    %2104 = vmatpush2.msra.mxu0 0.0
    %2105 = vmatprep.subr.mxu0 0.0
    %2106 = vmatpush2.msra.mxu0 0.0
    %2107 = vmatprep.subr.mxu0 0.0
    %2108 = vmatpush2.msra.mxu0 0.0
    %2109 = vmatprep.subr.mxu0 0.0
    %2110 = vmatpush2.msra.mxu0 0.0
    %2111 = vmatprep.subr.mxu0 %v621
    %2112 = vmatpush2.msra.mxu0 %v620
    %2113 = vmatprep.subr.mxu0 %v589
    %2114 = vmatpush2.msra.mxu0 %v588
    %2115 = vmatprep.mubr.f32.mxu0 %v794
    %2116 = vmatmul.mubr.f32.gmra.mxu0 %v40
    %v2117 = vpop.f32.mrf.mxu0
    %v2118 = vadd.f32 %v747, %v2117
    %v2119 = vpop.f32.mrf.mxu0
    %v2120 = vadd.f32 %v751, %v2119
    %2121 = vmatprep.mubr.f32.mxu0 %v797
    %2122 = vmatmul.mubr.f32.gmra.mxu0 %v42
    %v2123 = vpop.f32.mrf.mxu0
    %v2124 = vadd.f32 %v747, %v2123
    %v2125 = vpop.f32.mrf.mxu0
    %v2126 = vadd.f32 %v751, %v2125
    %2127 = vmatprep.mubr.f32.mxu0 %v800
    %2128 = vmatmul.mubr.f32.gmra.mxu0 %v44
    %v2129 = vpop.f32.mrf.mxu0
    %v2130 = vadd.f32 %v747, %v2129
    %v2131 = vpop.f32.mrf.mxu0
    %v2132 = vadd.f32 %v751, %v2131
    %2133 = vmatprep.mubr.f32.mxu0 %v803
    %2134 = vmatmul.mubr.f32.gmra.mxu0 %v46
    %v2135 = vpop.f32.mrf.mxu0
    %v2136 = vadd.f32 %v747, %v2135
    %v2137 = vpop.f32.mrf.mxu0
    %v2138 = vadd.f32 %v751, %v2137
    %2139 = vdwg.mxu0
    %2140 = vmatprep.subr.mxu0 %v559
    %2141 = vmatpush1.msra.mxu0 %v558
    %2142 = vmatprep.subr.mxu0 %v527
    %2143 = vmatpush1.msra.mxu0 %v526
    %2144 = vmatprep.subr.mxu0 %v495
    %2145 = vmatpush1.msra.mxu0 %v494
    %2146 = vmatprep.subr.mxu0 %v463
    %2147 = vmatpush1.msra.mxu0 %v462
    %2148 = vmatprep.subr.mxu0 %v431
    %2149 = vmatpush1.msra.mxu0 %v430
    %2150 = vmatprep.subr.mxu0 %v399
    %2151 = vmatpush1.msra.mxu0 %v398
    %2152 = vmatprep.subr.mxu0 %v367
    %2153 = vmatpush1.msra.mxu0 %v366
    %2154 = vmatprep.subr.mxu0 %v335
    %2155 = vmatpush1.msra.mxu0 %v334
    %2156 = vmatprep.subr.mxu0 %v303
    %2157 = vmatpush1.msra.mxu0 %v302
    %2158 = vmatprep.subr.mxu0 %v271
    %2159 = vmatpush1.msra.mxu0 %v270
    %2160 = vmatprep.subr.mxu0 %v239
    %2161 = vmatpush1.msra.mxu0 %v238
    %2162 = vmatprep.subr.mxu0 %v207
    %2163 = vmatpush1.msra.mxu0 %v206
    %2164 = vmatprep.subr.mxu0 %v175
    %2165 = vmatpush1.msra.mxu0 %v174
    %2166 = vmatprep.subr.mxu0 %v143
    %2167 = vmatpush1.msra.mxu0 %v142
    %2168 = vmatprep.subr.mxu0 %v111
    %2169 = vmatpush1.msra.mxu0 %v110
    %2170 = vmatprep.subr.mxu0 %v79
    %2171 = vmatpush1.msra.mxu0 %v78
    %2172 = vmatprep.subr.mxu0 0.0
    %2173 = vmatpush2.msra.mxu0 0.0
    %2174 = vmatprep.subr.mxu0 0.0
    %2175 = vmatpush2.msra.mxu0 0.0
    %2176 = vmatprep.subr.mxu0 0.0
    %2177 = vmatpush2.msra.mxu0 0.0
    %2178 = vmatprep.subr.mxu0 0.0
    %2179 = vmatpush2.msra.mxu0 0.0
    %2180 = vmatprep.subr.mxu0 0.0
    %2181 = vmatpush2.msra.mxu0 0.0
    %2182 = vmatprep.subr.mxu0 0.0
    %2183 = vmatpush2.msra.mxu0 0.0
    %2184 = vmatprep.subr.mxu0 0.0
    %2185 = vmatpush2.msra.mxu0 0.0
    %2186 = vmatprep.subr.mxu0 0.0
    %2187 = vmatpush2.msra.mxu0 0.0
    %2188 = vmatprep.subr.mxu0 0.0
    %2189 = vmatpush2.msra.mxu0 0.0
    %2190 = vmatprep.subr.mxu0 0.0
    %2191 = vmatpush2.msra.mxu0 0.0
    %2192 = vmatprep.subr.mxu0 0.0
    %2193 = vmatpush2.msra.mxu0 0.0
    %2194 = vmatprep.subr.mxu0 0.0
    %2195 = vmatpush2.msra.mxu0 0.0
    %2196 = vmatprep.subr.mxu0 0.0
    %2197 = vmatpush2.msra.mxu0 0.0
    %2198 = vmatprep.subr.mxu0 0.0
    %2199 = vmatpush2.msra.mxu0 0.0
    %2200 = vmatprep.subr.mxu0 %v623
    %2201 = vmatpush2.msra.mxu0 %v622
    %2202 = vmatprep.subr.mxu0 %v591
    %2203 = vmatpush2.msra.mxu0 %v590
    %2204 = vmatprep.mubr.f32.mxu0 %v794
    %2205 = vmatmul.mubr.f32.gmra.mxu0 %v40
    %v2206 = vpop.f32.mrf.mxu0
    %v2207 = vadd.f32 %v755, %v2206
    %v2208 = vpop.f32.mrf.mxu0
    %v2209 = vadd.f32 %v759, %v2208
    %2210 = vmatprep.mubr.f32.mxu0 %v797
    %2211 = vmatmul.mubr.f32.gmra.mxu0 %v42
    %v2212 = vpop.f32.mrf.mxu0
    %v2213 = vadd.f32 %v755, %v2212
    %v2214 = vpop.f32.mrf.mxu0
    %v2215 = vadd.f32 %v759, %v2214
    %2216 = vmatprep.mubr.f32.mxu0 %v800
    %2217 = vmatmul.mubr.f32.gmra.mxu0 %v44
    %v2218 = vpop.f32.mrf.mxu0
    %v2219 = vadd.f32 %v755, %v2218
    %v2220 = vpop.f32.mrf.mxu0
    %v2221 = vadd.f32 %v759, %v2220
    %2222 = vmatprep.mubr.f32.mxu0 %v803
    %2223 = vmatmul.mubr.f32.gmra.mxu0 %v46
    %v2224 = vpop.f32.mrf.mxu0
    %v2225 = vadd.f32 %v755, %v2224
    %v2226 = vpop.f32.mrf.mxu0
    %v2227 = vadd.f32 %v759, %v2226
    %2228 = vdwg.mxu0
    %2229 = vst [vmem:[%s3] sm:$0xff] %v872
    %2230 = vst [vmem:[%s3 + $0x8] sm:$0xff] %v874
    %2231 = vst [vmem:[%s3 + $0x10] sm:$0xff] %v961
    %2232 = vst [vmem:[%s3 + $0x18] sm:$0xff] %v963
    %2233 = vst [vmem:[%s3 + $0x20] sm:$0xff] %v1050
    %2234 = vst [vmem:[%s3 + $0x28] sm:$0xff] %v1052
    %2235 = vst [vmem:[%s3 + $0x30] sm:$0xff] %v1139
    %2236 = vst [vmem:[%s3 + $0x38] sm:$0xff] %v1141
    %2237 = vst [vmem:[%s3 + $0x40] sm:$0xff] %v1228
    %2238 = vst [vmem:[%s3 + $0x48] sm:$0xff] %v1230
    %2239 = vst [vmem:[%s3 + $0x50] sm:$0xff] %v1317
    %2240 = vst [vmem:[%s3 + $0x58] sm:$0xff] %v1319
    %2241 = vst [vmem:[%s3 + $0x60] sm:$0xff] %v1406
    %2242 = vst [vmem:[%s3 + $0x68] sm:$0xff] %v1408
    %2243 = vst [vmem:[%s3 + $0x70] sm:$0xff] %v1495
    %2244 = vst [vmem:[%s3 + $0x78] sm:$0xff] %v1497
    %2245 = vst [vmem:[%s3 + $0x80] sm:$0xff] %v1584
    %2246 = vst [vmem:[%s3 + $0x88] sm:$0xff] %v1586
    %2247 = vst [vmem:[%s3 + $0x90] sm:$0xff] %v1673
    %2248 = vst [vmem:[%s3 + $0x98] sm:$0xff] %v1675
    %2249 = vst [vmem:[%s3 + $0xa0] sm:$0xff] %v1762
    %2250 = vst [vmem:[%s3 + $0xa8] sm:$0xff] %v1764
    %2251 = vst [vmem:[%s3 + $0xb0] sm:$0xff] %v1851
    %2252 = vst [vmem:[%s3 + $0xb8] sm:$0xff] %v1853
    %2253 = vst [vmem:[%s3 + $0xc0] sm:$0xff] %v1940
    %2254 = vst [vmem:[%s3 + $0xc8] sm:$0xff] %v1942
    %2255 = vst [vmem:[%s3 + $0xd0] sm:$0xff] %v2029
    %2256 = vst [vmem:[%s3 + $0xd8] sm:$0xff] %v2031
    %2257 = vst [vmem:[%s3 + $0xe0] sm:$0xff] %v2118
    %2258 = vst [vmem:[%s3 + $0xe8] sm:$0xff] %v2120
    %2259 = vst [vmem:[%s3 + $0xf0] sm:$0xff] %v2207
    %2260 = vst [vmem:[%s3 + $0xf8] sm:$0xff] %v2209
    %2261 = vst [vmem:[%s3 + $0x100] sm:$0xff] %v878
    %2262 = vst [vmem:[%s3 + $0x108] sm:$0xff] %v880
    %2263 = vst [vmem:[%s3 + $0x110] sm:$0xff] %v967
    %2264 = vst [vmem:[%s3 + $0x118] sm:$0xff] %v969
    %2265 = vst [vmem:[%s3 + $0x120] sm:$0xff] %v1056
    %2266 = vst [vmem:[%s3 + $0x128] sm:$0xff] %v1058
    %2267 = vst [vmem:[%s3 + $0x130] sm:$0xff] %v1145
    %2268 = vst [vmem:[%s3 + $0x138] sm:$0xff] %v1147
    %2269 = vst [vmem:[%s3 + $0x140] sm:$0xff] %v1234
    %2270 = vst [vmem:[%s3 + $0x148] sm:$0xff] %v1236
    %2271 = vst [vmem:[%s3 + $0x150] sm:$0xff] %v1323
    %2272 = vst [vmem:[%s3 + $0x158] sm:$0xff] %v1325
    %2273 = vst [vmem:[%s3 + $0x160] sm:$0xff] %v1412
    %2274 = vst [vmem:[%s3 + $0x168] sm:$0xff] %v1414
    %2275 = vst [vmem:[%s3 + $0x170] sm:$0xff] %v1501
    %2276 = vst [vmem:[%s3 + $0x178] sm:$0xff] %v1503
    %2277 = vst [vmem:[%s3 + $0x180] sm:$0xff] %v1590
    %2278 = vst [vmem:[%s3 + $0x188] sm:$0xff] %v1592
    %2279 = vst [vmem:[%s3 + $0x190] sm:$0xff] %v1679
    %2280 = vst [vmem:[%s3 + $0x198] sm:$0xff] %v1681
    %2281 = vst [vmem:[%s3 + $0x1a0] sm:$0xff] %v1768
    %2282 = vst [vmem:[%s3 + $0x1a8] sm:$0xff] %v1770
    %2283 = vst [vmem:[%s3 + $0x1b0] sm:$0xff] %v1857
    %2284 = vst [vmem:[%s3 + $0x1b8] sm:$0xff] %v1859
    %2285 = vst [vmem:[%s3 + $0x1c0] sm:$0xff] %v1946
    %2286 = vst [vmem:[%s3 + $0x1c8] sm:$0xff] %v1948
    %2287 = vst [vmem:[%s3 + $0x1d0] sm:$0xff] %v2035
    %2288 = vst [vmem:[%s3 + $0x1d8] sm:$0xff] %v2037
    %2289 = vst [vmem:[%s3 + $0x1e0] sm:$0xff] %v2124
    %2290 = vst [vmem:[%s3 + $0x1e8] sm:$0xff] %v2126
    %2291 = vst [vmem:[%s3 + $0x1f0] sm:$0xff] %v2213
    %2292 = vst [vmem:[%s3 + $0x1f8] sm:$0xff] %v2215
    %2293 = vst [vmem:[%s3 + $0x200] sm:$0xff] %v884
    %2294 = vst [vmem:[%s3 + $0x208] sm:$0xff] %v886
    %2295 = vst [vmem:[%s3 + $0x210] sm:$0xff] %v973
    %2296 = vst [vmem:[%s3 + $0x218] sm:$0xff] %v975
    %2297 = vst [vmem:[%s3 + $0x220] sm:$0xff] %v1062
    %2298 = vst [vmem:[%s3 + $0x228] sm:$0xff] %v1064
    %2299 = vst [vmem:[%s3 + $0x230] sm:$0xff] %v1151
    %2300 = vst [vmem:[%s3 + $0x238] sm:$0xff] %v1153
    %2301 = vst [vmem:[%s3 + $0x240] sm:$0xff] %v1240
    %2302 = vst [vmem:[%s3 + $0x248] sm:$0xff] %v1242
    %2303 = vst [vmem:[%s3 + $0x250] sm:$0xff] %v1329
    %2304 = vst [vmem:[%s3 + $0x258] sm:$0xff] %v1331
    %2305 = vst [vmem:[%s3 + $0x260] sm:$0xff] %v1418
    %2306 = vst [vmem:[%s3 + $0x268] sm:$0xff] %v1420
    %2307 = vst [vmem:[%s3 + $0x270] sm:$0xff] %v1507
    %2308 = vst [vmem:[%s3 + $0x278] sm:$0xff] %v1509
    %2309 = vst [vmem:[%s3 + $0x280] sm:$0xff] %v1596
    %2310 = vst [vmem:[%s3 + $0x288] sm:$0xff] %v1598
    %2311 = vst [vmem:[%s3 + $0x290] sm:$0xff] %v1685
    %2312 = vst [vmem:[%s3 + $0x298] sm:$0xff] %v1687
    %2313 = vst [vmem:[%s3 + $0x2a0] sm:$0xff] %v1774
    %2314 = vst [vmem:[%s3 + $0x2a8] sm:$0xff] %v1776
    %2315 = vst [vmem:[%s3 + $0x2b0] sm:$0xff] %v1863
    %2316 = vst [vmem:[%s3 + $0x2b8] sm:$0xff] %v1865
    %2317 = vst [vmem:[%s3 + $0x2c0] sm:$0xff] %v1952
    %2318 = vst [vmem:[%s3 + $0x2c8] sm:$0xff] %v1954
    %2319 = vst [vmem:[%s3 + $0x2d0] sm:$0xff] %v2041
    %2320 = vst [vmem:[%s3 + $0x2d8] sm:$0xff] %v2043
    %2321 = vst [vmem:[%s3 + $0x2e0] sm:$0xff] %v2130
    %2322 = vst [vmem:[%s3 + $0x2e8] sm:$0xff] %v2132
    %2323 = vst [vmem:[%s3 + $0x2f0] sm:$0xff] %v2219
    %2324 = vst [vmem:[%s3 + $0x2f8] sm:$0xff] %v2221
    %2325 = vst [vmem:[%s3 + $0x300] sm:$0xff] %v890
    %2326 = vst [vmem:[%s3 + $0x308] sm:$0xff] %v892
    %2327 = vst [vmem:[%s3 + $0x310] sm:$0xff] %v979
    %2328 = vst [vmem:[%s3 + $0x318] sm:$0xff] %v981
    %2329 = vst [vmem:[%s3 + $0x320] sm:$0xff] %v1068
    %2330 = vst [vmem:[%s3 + $0x328] sm:$0xff] %v1070
    %2331 = vst [vmem:[%s3 + $0x330] sm:$0xff] %v1157
    %2332 = vst [vmem:[%s3 + $0x338] sm:$0xff] %v1159
    %2333 = vst [vmem:[%s3 + $0x340] sm:$0xff] %v1246
    %2334 = vst [vmem:[%s3 + $0x348] sm:$0xff] %v1248
    %2335 = vst [vmem:[%s3 + $0x350] sm:$0xff] %v1335
    %2336 = vst [vmem:[%s3 + $0x358] sm:$0xff] %v1337
    %2337 = vst [vmem:[%s3 + $0x360] sm:$0xff] %v1424
    %2338 = vst [vmem:[%s3 + $0x368] sm:$0xff] %v1426
    %2339 = vst [vmem:[%s3 + $0x370] sm:$0xff] %v1513
    %2340 = vst [vmem:[%s3 + $0x378] sm:$0xff] %v1515
    %2341 = vst [vmem:[%s3 + $0x380] sm:$0xff] %v1602
    %2342 = vst [vmem:[%s3 + $0x388] sm:$0xff] %v1604
    %2343 = vst [vmem:[%s3 + $0x390] sm:$0xff] %v1691
    %2344 = vst [vmem:[%s3 + $0x398] sm:$0xff] %v1693
    %2345 = vst [vmem:[%s3 + $0x3a0] sm:$0xff] %v1780
    %2346 = vst [vmem:[%s3 + $0x3a8] sm:$0xff] %v1782
    %2347 = vst [vmem:[%s3 + $0x3b0] sm:$0xff] %v1869
    %2348 = vst [vmem:[%s3 + $0x3b8] sm:$0xff] %v1871
    %2349 = vst [vmem:[%s3 + $0x3c0] sm:$0xff] %v1958
    %2350 = vst [vmem:[%s3 + $0x3c8] sm:$0xff] %v1960
    %2351 = vst [vmem:[%s3 + $0x3d0] sm:$0xff] %v2047
    %2352 = vst [vmem:[%s3 + $0x3d8] sm:$0xff] %v2049
    %2353 = vst [vmem:[%s3 + $0x3e0] sm:$0xff] %v2136
    %2354 = vst [vmem:[%s3 + $0x3e8] sm:$0xff] %v2138
    %2355 = vst [vmem:[%s3 + $0x3f0] sm:$0xff] %v2225
    %2356 = vst [vmem:[%s3 + $0x3f8] sm:$0xff] %v2227
    // Predicated region
    $region22: #{forward.1} parent=1 // pred_check
      _
    $region23: #{forward.1} parent=1 // pred_check_branch
      %2358 = sbr.rel (0) target = $region25
    $region24: #{forward.1} parent=1 // pred_region
      _
    $region25: #{forward.1} parent=1 // pred_fallthru
      _
    // Predicated region
    $region26: #{forward.1} parent=1 // pred_check
      _
    $region27: #{forward.1} parent=1 // pred_check_branch
      %2360 = sbr.rel (0) target = $region29
    $region28: #{forward.1} parent=1 // pred_region
      _
    $region29: #{forward.1} parent=1 // pred_fallthru
      _
    %2361 = vsyncpa [#allocation3], 1
    %2362 = vsyncpa [#allocation5], 1

</llo_original>
